<compile_context>
chip_gen: v7x
topology: tpu7x:2x2x1
jax: 0.10.0
libtpu: 0.0.40
codegen_flags: <defaults>
</compile_context>

<pallas_src>
import functools
import math

import jax
import jax.numpy as jnp
import numpy as np
from jax.experimental import pallas as pl
from jax.experimental.pallas import tpu as pltpu


def _round_up(x, m):
    return ((x + m - 1) // m) * m


def _cdiv(a, b):
    return -(-a // b)


# ----------------------------------------------------------------------------
# Fused kernel.
# ----------------------------------------------------------------------------
def _map_sample_kernel(x_ref, w_ref, const_ref, coord_ref,
                       feat_ref, pos_ref,
                       *, n_feat_rows, tile_m, cout, cout_pad, pos_w, eps):
    # ---- projection + LayerNorm + GELU -------------------------------------
    # Only tiles containing at least one real grid-feature row (< n_feat_rows)
    # pay for the MXU pass, the LN/GELU VPU/EUP work and the feat store.  Rows
    # of such a tile that lie beyond n (zero-padded x) produce harmless values
    # that are sliced off in the wrapper (random bias keeps var > 0).
    @pl.when(pl.program_id(0) * tile_m < n_feat_rows)
    def _():
        y = jnp.dot(x_ref[...], w_ref[...], preferred_element_type=jnp.float32)
        y = y + const_ref[0:1, 0:cout_pad]                   # bias row

        # LayerNorm over the real `cout` channels.  Pad lanes of y are exactly
        # 0 (zero W columns + zero bias), so the compensated two-pass variance
        # below is exact: pad lanes contribute (cout_pad - cout) * mu^2.
        inv_c = jnp.float32(1.0 / cout)
        mu = jnp.sum(y, axis=-1, keepdims=True) * inv_c
        d = y - mu
        var = (jnp.sum(d * d, axis=-1, keepdims=True)
               - jnp.float32(cout_pad - cout) * mu * mu) * inv_c
        yn = d * jax.lax.rsqrt(var + jnp.float32(eps))
        yn = yn * const_ref[1:2, 0:cout_pad] + const_ref[2:3, 0:cout_pad]

        # GELU, tanh approximation (EUP tanh).
        k0 = jnp.float32(0.7978845608028654)                 # sqrt(2/pi)
        g = 0.5 * yn * (1.0 + jnp.tanh(k0 * (yn + 0.044715 * yn * yn * yn)))
        feat_ref[...] = g.astype(feat_ref.dtype)             # bf16 store

    # ---- RoPE position embeddings (grid rows followed by path rows) --------
    # const_ref rows 3..5 hold, for coordinate dim d, inv_freq placed at the
    # lanes that dim owns in the cat((e, e), -1) layout, duplicated once more
    # at lane offset sin_off; row 6 is 0 on the cos half and -pi/2 on the sin
    # half, so a single EUP cos pass yields packed [cos | sin]:
    #     emb = sum_d coord[:, d] * freq_row_d + phase_row
    #     pos = cos(emb)
    c = coord_ref[...].astype(jnp.float32)                   # (tile_m, 8); cols 0..2 real
    emb = (c[:, 0:1] * const_ref[3:4, 0:pos_w]
           + c[:, 1:2] * const_ref[4:5, 0:pos_w]
           + c[:, 2:3] * const_ref[5:6, 0:pos_w]
           + const_ref[6:7, 0:pos_w])
    pos_ref[...] = jnp.cos(emb)


def _choose_grid(rows):
    """Return (tile_m, num_steps).  tile_m is a multiple of 16 (bf16 sublane),
    capped at 1024 rows (per-step pipeline overhead ~0.35us amortized, VMEM
    ~2 MiB double-buffered at 1024).  For anything above 32 rows the step
    count is >= 2 and even so both v7x TensorCores get equal work."""
    rows16 = _round_up(max(rows, 16), 16)
    if rows16 <= 32:
        return rows16, 1
    steps = max(2, _cdiv(rows16, 1024))
    steps += steps % 2                                   # even step count
    tile_m = _round_up(_cdiv(rows16, steps), 16)
    return tile_m, steps


def map_sample_apply(kp, feat, grid_coord, path_coord):
    n, cin = feat.shape
    m = path_coord.shape[0]
    rows = n + m
    cout, cout_pad = kp["cout"], kp["cout_pad"]
    pos_w, six_f, sin_off = kp["pos_w"], kp["six_f"], kp["sin_off"]

    tile_m, steps = _choose_grid(rows)
    total = tile_m * steps

    # Minimal wrapper glue: one cast+pad for x, one concat+pad for coords.
    # Pad rows are zeros (safe through LN/GELU and cos) and sliced off below.
    x = jnp.pad(feat.astype(jnp.bfloat16), ((0, total - n), (0, 0)))
    coords = jnp.pad(
        jnp.concatenate([grid_coord, path_coord], axis=0).astype(jnp.int32),
        ((0, total - rows), (0, 5)))                        # (total, 8)

    kernel = functools.partial(
        _map_sample_kernel, n_feat_rows=n, tile_m=tile_m,
        cout=cout, cout_pad=cout_pad, pos_w=pos_w, eps=1e-5)

    feat_pad, pos_pad = pl.pallas_call(
        kernel,
        out_shape=(
            jax.ShapeDtypeStruct((total, cout_pad), jnp.bfloat16),
            jax.ShapeDtypeStruct((total, pos_w), jnp.float32),
        ),
        grid=(steps,),
        in_specs=[
            pl.BlockSpec((tile_m, cin), lambda i: (i, 0)),          # x tile
            pl.BlockSpec((cin, cout_pad), lambda i: (0, 0)),        # W (resident)
            pl.BlockSpec((8, kp["const_w"]), lambda i: (0, 0)),     # packed consts
            pl.BlockSpec((tile_m, 8), lambda i: (i, 0)),            # coords tile
        ],
        out_specs=(
            pl.BlockSpec((tile_m, cout_pad), lambda i: (i, 0)),
            pl.BlockSpec((tile_m, pos_w), lambda i: (i, 0)),
        ),
        compiler_params=pltpu.CompilerParams(
            dimension_semantics=("parallel",)),
    )(x, kp["w_t"], kp["consts"], coords)

    # Module-shaped views.  A fused downstream consumer could instead read the
    # packed/padded slabs directly and skip these non-128-aligned slices.
    feat_out = feat_pad[:n, :cout]                               # bf16
    grid_pos = (pos_pad[:n, :six_f], pos_pad[:n, sin_off:sin_off + six_f])
    path_pos = (pos_pad[n:rows, :six_f], pos_pad[n:rows, sin_off:sin_off + six_f])
    return feat_out, grid_pos, path_pos


# ----------------------------------------------------------------------------
# Parameters (PyTorch-shaped) + one-time kernel-layout packing.
# ----------------------------------------------------------------------------
def make_map_sample_params(key, in_channels, out_channels, num_heads):
    head_dim = out_channels // num_heads
    # ROPE(head_dim, dim=3): inv_freq = 1/theta^(arange(0, head_dim//3, 2)/head_dim)
    inv_freq = 1.0 / (10000.0 ** (
        jnp.arange(0, head_dim // 3, 2, dtype=jnp.float32) / head_dim))
    k1, k2 = jax.random.split(key)
    bound = 1.0 / math.sqrt(in_channels)
    w = jax.random.uniform(k1, (out_channels, in_channels), jnp.float32, -bound, bound)
    b = jax.random.uniform(k2, (out_channels,), jnp.float32, -bound, bound)
    gamma = jnp.ones((out_channels,), jnp.float32)   # LayerNorm default init
    beta = jnp.zeros((out_channels,), jnp.float32)
    return dict(w=w, b=b, gamma=gamma, beta=beta, inv_freq=inv_freq)


def pack_kernel_params(params, in_channels, out_channels):
    """Pre-transposed, 128-lane-padded bf16 weight + one (8, width) f32 slab:
    row 0 bias, 1 gamma, 2 beta, 3..5 per-dim duplicated RoPE frequency rows
    (replicated at lane offset sin_off for the sin half), 6 phase row
    (0 on the cos half, -pi/2 on the sin half)."""
    inv_freq = np.asarray(params["inv_freq"], np.float32)
    f = int(inv_freq.shape[0])
    six_f = 6 * f                                     # width of cat((e, e), -1)
    cout_pad = _round_up(out_channels, 128)
    sin_off = _round_up(six_f, 64)                    # cos half width
    pos_w = 2 * sin_off                               # multiple of 128
    const_w = max(cout_pad, pos_w)

    w_t = np.zeros((in_channels, cout_pad), np.float32)
    w_t[:, :out_channels] = np.asarray(params["w"], np.float32).T

    consts = np.zeros((8, const_w), np.float32)
    consts[0, :out_channels] = np.asarray(params["b"], np.float32)
    consts[1, :out_channels] = np.asarray(params["gamma"], np.float32)
    consts[2, :out_channels] = np.asarray(params["beta"], np.float32)
    for half_off in (0, sin_off):                     # cos half, sin half
        for d in range(3):
            consts[3 + d, half_off + d * f: half_off + (d + 1) * f] = inv_freq
            consts[3 + d,
                   half_off + 3 * f + d * f: half_off + 3 * f + (d + 1) * f] = inv_freq
    consts[6, sin_off:pos_w] = -np.pi / 2.0           # sin(x) = cos(x - pi/2)

    return dict(
        w_t=jnp.asarray(w_t, jnp.bfloat16),
        consts=jnp.asarray(consts, jnp.float32),
        cout=out_channels, cout_pad=cout_pad,
        six_f=six_f, sin_off=sin_off, pos_w=pos_w, const_w=const_w,
    )


def map_sample_forward(kparams, map_dict, *, shuffle_orders=True, shuffle_key=None):
    feat, grid_pos, path_pos = map_sample_apply(
        kparams, map_dict["feat"], map_dict["grid_coord"], map_dict["path_coord"])
    map_dict["feat"] = feat                           # bf16 (store-bandwidth win)
    map_dict["grid_position_embeddings"] = grid_pos
    map_dict["path_position_embeddings"] = path_pos
    if shuffle_orders:
        # TODO(synk): torch.randperm row shuffle is random-index glue; done in plain JAX.
        perm = jax.random.permutation(shuffle_key, map_dict["spatial_order"].shape[0])
        map_dict["spatial_order"] = map_dict["spatial_order"][perm]
        map_dict["spatial_inverse"] = map_dict["spatial_inverse"][perm]
    return map_dict


# ----------------------------------------------------------------------------
if __name__ == "__main__":
    key = jax.random.PRNGKey(0)
    kp_, kf, kg, kpc, ks = jax.random.split(key, 5)

    N, M = 64, 32                       # grid tokens, path tokens
    in_channels, out_channels, num_heads = 32, 64, 4
    params = make_map_sample_params(kp_, in_channels, out_channels, num_heads)
    kparams = pack_kernel_params(params, in_channels, out_channels)

    feat = jax.random.normal(kf, (N, in_channels), jnp.float32)
    max_grid_coord = 15
    grid_coord = jax.random.randint(kg, (N, 3), 0, max_grid_coord + 1, jnp.int32)
    max_path_coord = 7
    path_coord = jax.random.randint(kpc, (M, 3), 0, max_path_coord + 1, jnp.int32)

    num_orders = 4
    spatial_order = jnp.stack(
        [jax.random.permutation(jax.random.fold_in(ks, i), N) for i in range(num_orders)]
    ).astype(jnp.int32)
    spatial_inverse = jnp.stack(
        [jnp.argsort(spatial_order[i]) for i in range(num_orders)]
    ).astype(jnp.int32)

    map_dict = dict(
        feat=feat,
        max_grid_coord=max_grid_coord,
        grid_coord=grid_coord,
        max_path_coord=max_path_coord,
        path_coord=path_coord,
        spatial_order=spatial_order,
        spatial_inverse=spatial_inverse,
    )

    out = map_sample_forward(
        kparams, map_dict, shuffle_orders=True, shuffle_key=jax.random.fold_in(key, 123)
    )
    jax.block_until_ready(out["feat"])
    jax.block_until_ready(out["grid_position_embeddings"])
    jax.block_until_ready(out["path_position_embeddings"])

    # --- plain-JAX reference check (bf16-rounded operands, matching the kernel) ---
    xb = feat.astype(jnp.bfloat16).astype(jnp.float32)
    wb = params["w"].astype(jnp.bfloat16).astype(jnp.float32)
    y = xb @ wb.T + params["b"]
    mu = y.mean(-1, keepdims=True)
    var = ((y - mu) ** 2).mean(-1, keepdims=True)
    yn = (y - mu) / jnp.sqrt(var + 1e-5) * params["gamma"] + params["beta"]
    c = math.sqrt(2.0 / math.pi)
    ref_feat = 0.5 * yn * (1.0 + jnp.tanh(c * (yn + 0.044715 * yn ** 3)))
    assert out["feat"].shape == (N, out_channels)
    assert out["feat"].dtype == jnp.bfloat16
    assert jnp.allclose(out["feat"].astype(jnp.float32), ref_feat, rtol=5e-3, atol=5e-3)

    def rope_ref(coord, max_coord):
        full = (jnp.arange(max_coord + 1, dtype=jnp.float32)[:, None]
                * params["inv_freq"][None, :])
        e = full[coord].reshape(coord.shape[0], -1)
        e = jnp.concatenate([e, e], axis=-1)
        return jnp.cos(e), jnp.sin(e)

    gref_cos, gref_sin = rope_ref(grid_coord, max_grid_coord)
    pref_cos, pref_sin = rope_ref(path_coord, max_path_coord)
    assert out["grid_position_embeddings"][0].shape == gref_cos.shape
    assert jnp.allclose(out["grid_position_embeddings"][0], gref_cos, rtol=1e-4, atol=1e-5)
    assert jnp.allclose(out["grid_position_embeddings"][1], gref_sin, rtol=1e-4, atol=1e-5)
    assert jnp.allclose(out["path_position_embeddings"][0], pref_cos, rtol=1e-4, atol=1e-5)
    assert jnp.allclose(out["path_position_embeddings"][1], pref_sin, rtol=1e-4, atol=1e-5)

    print("KERNEL_OK")
</pallas_src>

<mosaic_0001>
module attributes {stable_mosaic.version = 11 : i64} {
  func.func @_map_sample_kernel(%arg0: i32, %arg1: memref<48x32xbf16, #tpu.memory_space<vmem>>, %arg2: memref<32x128xbf16, #tpu.memory_space<vmem>>, %arg3: memref<8x128xf32, #tpu.memory_space<vmem>>, %arg4: memref<48x8xi32, #tpu.memory_space<vmem>>, %arg5: memref<48x128xbf16, #tpu.memory_space<vmem>>, %arg6: memref<48x128xf32, #tpu.memory_space<vmem>>) attributes {dimension_semantics = [#tpu.dimension_semantics<parallel>], iteration_bounds = array<i64: 2>, scalar_prefetch = 0 : i64, scratch_operands = 0 : i64, tpu.core_type = #tpu.core_type<tc>, window_params = [{transform_indices = @transform_0, window_bounds = array<i64: 48, 32>}, {pipeline_mode = #tpu.pipeline_mode<synchronous>, transform_indices = @transform_1, window_bounds = array<i64: 32, 128>}, {pipeline_mode = #tpu.pipeline_mode<synchronous>, transform_indices = @transform_2, window_bounds = array<i64: 8, 128>}, {transform_indices = @transform_3, window_bounds = array<i64: 48, 8>}, {transform_indices = @transform_4, window_bounds = array<i64: 48, 128>}, {transform_indices = @transform_5, window_bounds = array<i64: 48, 128>}]} {
    %c48_i32 = arith.constant 48 : i32
    %0 = arith.muli %arg0, %c48_i32 : i32
    %c64_i32 = arith.constant 64 : i32
    %1 = arith.cmpi slt, %0, %c64_i32 : i32
    %2 = arith.extui %1 : i1 to i32
    %c0_i32 = arith.constant 0 : i32
    %3 = arith.cmpi ne, %2, %c0_i32 : i32
    scf.if %3 {
      %c0_7 = arith.constant 0 : index
      %c0_8 = arith.constant 0 : index
      %28 = vector.load %arg1[%c0_7, %c0_8] : memref<48x32xbf16, #tpu.memory_space<vmem>>, vector<48x32xbf16>
      %c0_9 = arith.constant 0 : index
      %c0_10 = arith.constant 0 : index
      %29 = vector.load %arg2[%c0_9, %c0_10] : memref<32x128xbf16, #tpu.memory_space<vmem>>, vector<32x128xbf16>
      %cst = arith.constant dense<0.000000e+00> : vector<48x128xf32>
      %30 = tpu.matmul %28, %29, %cst {dimension_numbers = #tpu.dot_dimension_numbers<[1], [0], [0], [1], [0, 0, 1, 1], [], []>} : vector<48x32xbf16>, vector<32x128xbf16>, vector<48x128xf32> -> vector<48x128xf32>
      %c0_11 = arith.constant 0 : index
      %c0_12 = arith.constant 0 : index
      %31 = vector.load %arg3[%c0_11, %c0_12] : memref<8x128xf32, #tpu.memory_space<vmem>>, vector<1x128xf32>
      %32 = vector.broadcast %31 : vector<1x128xf32> to vector<48x128xf32>
      %33 = arith.addf %30, %32 : vector<48x128xf32>
      %cst_13 = arith.constant dense<0.000000e+00> : vector<48xf32>
      %34 = vector.multi_reduction <add>, %33, %cst_13 [1] : vector<48x128xf32> to vector<48xf32>
      %35 = vector.shape_cast %34 : vector<48xf32> to vector<48x1xf32>
      %cst_14 = arith.constant 1.562500e-02 : f32
      %36 = vector.broadcast %cst_14 : f32 to vector<48x1xf32>
      %37 = arith.mulf %35, %36 : vector<48x1xf32>
      %38 = vector.broadcast %37 : vector<48x1xf32> to vector<48x128xf32>
      %39 = arith.subf %33, %38 : vector<48x128xf32>
      %40 = arith.mulf %39, %39 : vector<48x128xf32>
      %cst_15 = arith.constant dense<0.000000e+00> : vector<48xf32>
      %41 = vector.multi_reduction <add>, %40, %cst_15 [1] : vector<48x128xf32> to vector<48xf32>
      %42 = vector.shape_cast %41 : vector<48xf32> to vector<48x1xf32>
      %cst_16 = arith.constant 6.400000e+01 : f32
      %43 = vector.broadcast %cst_16 : f32 to vector<48x1xf32>
      %44 = arith.mulf %43, %37 : vector<48x1xf32>
      %45 = arith.mulf %44, %37 : vector<48x1xf32>
      %46 = arith.subf %42, %45 : vector<48x1xf32>
      %cst_17 = arith.constant 1.562500e-02 : f32
      %47 = vector.broadcast %cst_17 : f32 to vector<48x1xf32>
      %48 = arith.mulf %46, %47 : vector<48x1xf32>
      %cst_18 = arith.constant 9.99999974E-6 : f32
      %49 = vector.broadcast %cst_18 : f32 to vector<48x1xf32>
      %50 = arith.addf %48, %49 : vector<48x1xf32>
      %51 = math.rsqrt %50 : vector<48x1xf32>
      %52 = vector.broadcast %51 : vector<48x1xf32> to vector<48x128xf32>
      %53 = arith.mulf %39, %52 : vector<48x128xf32>
      %c1 = arith.constant 1 : index
      %c0_19 = arith.constant 0 : index
      %54 = vector.load %arg3[%c1, %c0_19] : memref<8x128xf32, #tpu.memory_space<vmem>>, vector<1x128xf32>
      %55 = vector.broadcast %54 : vector<1x128xf32> to vector<48x128xf32>
      %56 = arith.mulf %53, %55 : vector<48x128xf32>
      %c2 = arith.constant 2 : index
      %c0_20 = arith.constant 0 : index
      %57 = vector.load %arg3[%c2, %c0_20] : memref<8x128xf32, #tpu.memory_space<vmem>>, vector<1x128xf32>
      %58 = vector.broadcast %57 : vector<1x128xf32> to vector<48x128xf32>
      %59 = arith.addf %56, %58 : vector<48x128xf32>
      %cst_21 = arith.constant 5.000000e-01 : f32
      %60 = vector.broadcast %cst_21 : f32 to vector<48x128xf32>
      %61 = arith.mulf %60, %59 : vector<48x128xf32>
      %cst_22 = arith.constant 4.471500e-02 : f32
      %62 = vector.broadcast %cst_22 : f32 to vector<48x128xf32>
      %63 = arith.mulf %62, %59 : vector<48x128xf32>
      %64 = arith.mulf %63, %59 : vector<48x128xf32>
      %65 = arith.mulf %64, %59 : vector<48x128xf32>
      %66 = arith.addf %59, %65 : vector<48x128xf32>
      %cst_23 = arith.constant 0.797884583 : f32
      %67 = vector.broadcast %cst_23 : f32 to vector<48x128xf32>
      %68 = arith.mulf %67, %66 : vector<48x128xf32>
      %69 = math.tanh %68 : vector<48x128xf32>
      %cst_24 = arith.constant 1.000000e+00 : f32
      %70 = vector.broadcast %cst_24 : f32 to vector<48x128xf32>
      %71 = arith.addf %70, %69 : vector<48x128xf32>
      %72 = arith.mulf %61, %71 : vector<48x128xf32>
      %73 = arith.truncf %72 : vector<48x128xf32> to vector<48x128xbf16>
      %c0_25 = arith.constant 0 : index
      %c0_26 = arith.constant 0 : index
      %74 = vector.load %arg5[%c0_25, %c0_26] : memref<48x128xbf16, #tpu.memory_space<vmem>>, vector<48x128xbf16>
      tpu.vector_store %arg5[%c0_25, %c0_26], %73 {strides = array<i32>} : memref<48x128xbf16, #tpu.memory_space<vmem>>, vector<48x128xbf16>,
    } else {
    }
    %c0 = arith.constant 0 : index
    %c0_0 = arith.constant 0 : index
    %4 = vector.load %arg4[%c0, %c0_0] : memref<48x8xi32, #tpu.memory_space<vmem>>, vector<48x8xi32>
    %5 = arith.sitofp %4 : vector<48x8xi32> to vector<48x8xf32>
    %6 = vector.extract_strided_slice %5 {offsets = [0, 0], sizes = [48, 1], strides = [1, 1]} : vector<48x8xf32> to vector<48x1xf32>
    %c3 = arith.constant 3 : index
    %c0_1 = arith.constant 0 : index
    %7 = vector.load %arg3[%c3, %c0_1] : memref<8x128xf32, #tpu.memory_space<vmem>>, vector<1x128xf32>
    %8 = vector.broadcast %6 : vector<48x1xf32> to vector<48x128xf32>
    %9 = vector.broadcast %7 : vector<1x128xf32> to vector<48x128xf32>
    %10 = arith.mulf %8, %9 : vector<48x128xf32>
    %11 = vector.extract_strided_slice %5 {offsets = [0, 1], sizes = [48, 1], strides = [1, 1]} : vector<48x8xf32> to vector<48x1xf32>
    %c4 = arith.constant 4 : index
    %c0_2 = arith.constant 0 : index
    %12 = vector.load %arg3[%c4, %c0_2] : memref<8x128xf32, #tpu.memory_space<vmem>>, vector<1x128xf32>
    %13 = vector.broadcast %11 : vector<48x1xf32> to vector<48x128xf32>
    %14 = vector.broadcast %12 : vector<1x128xf32> to vector<48x128xf32>
    %15 = arith.mulf %13, %14 : vector<48x128xf32>
    %16 = arith.addf %10, %15 : vector<48x128xf32>
    %17 = vector.extract_strided_slice %5 {offsets = [0, 2], sizes = [48, 1], strides = [1, 1]} : vector<48x8xf32> to vector<48x1xf32>
    %c5 = arith.constant 5 : index
    %c0_3 = arith.constant 0 : index
    %18 = vector.load %arg3[%c5, %c0_3] : memref<8x128xf32, #tpu.memory_space<vmem>>, vector<1x128xf32>
    %19 = vector.broadcast %17 : vector<48x1xf32> to vector<48x128xf32>
    %20 = vector.broadcast %18 : vector<1x128xf32> to vector<48x128xf32>
    %21 = arith.mulf %19, %20 : vector<48x128xf32>
    %22 = arith.addf %16, %21 : vector<48x128xf32>
    %c6 = arith.constant 6 : index
    %c0_4 = arith.constant 0 : index
    %23 = vector.load %arg3[%c6, %c0_4] : memref<8x128xf32, #tpu.memory_space<vmem>>, vector<1x128xf32>
    %24 = vector.broadcast %23 : vector<1x128xf32> to vector<48x128xf32>
    %25 = arith.addf %22, %24 : vector<48x128xf32>
    %26 = math.cos %25 : vector<48x128xf32>
    %c0_5 = arith.constant 0 : index
    %c0_6 = arith.constant 0 : index
    %27 = vector.load %arg6[%c0_5, %c0_6] : memref<48x128xf32, #tpu.memory_space<vmem>>, vector<48x128xf32>
    tpu.vector_store %arg6[%c0_5, %c0_6], %26 {strides = array<i32>} : memref<48x128xf32, #tpu.memory_space<vmem>>, vector<48x128xf32>,
    return
  }
  func.func @transform_0(%arg0: i32) -> (i32, i32) {
    %c0_i32 = arith.constant 0 : i32
    %c0_i32_0 = arith.constant 0 : i32
    return %arg0, %c0_i32 : i32, i32
  }
  func.func @transform_1(%arg0: i32) -> (i32, i32) {
    %c0_i32 = arith.constant 0 : i32
    %c0_i32_0 = arith.constant 0 : i32
    %c0_i32_1 = arith.constant 0 : i32
    return %c0_i32, %c0_i32_0 : i32, i32
  }
  func.func @transform_2(%arg0: i32) -> (i32, i32) {
    %c0_i32 = arith.constant 0 : i32
    %c0_i32_0 = arith.constant 0 : i32
    %c0_i32_1 = arith.constant 0 : i32
    return %c0_i32, %c0_i32_0 : i32, i32
  }
  func.func @transform_3(%arg0: i32) -> (i32, i32) {
    %c0_i32 = arith.constant 0 : i32
    %c0_i32_0 = arith.constant 0 : i32
    return %arg0, %c0_i32 : i32, i32
  }
  func.func @transform_4(%arg0: i32) -> (i32, i32) {
    %c0_i32 = arith.constant 0 : i32
    %c0_i32_0 = arith.constant 0 : i32
    return %arg0, %c0_i32 : i32, i32
  }
  func.func @transform_5(%arg0: i32) -> (i32, i32) {
    %c0_i32 = arith.constant 0 : i32
    %c0_i32_0 = arith.constant 0 : i32
    return %arg0, %c0_i32 : i32, i32
  }
}

</mosaic_0001>

<llo_original>
// kernel: tpu_custom_call.1
$region0: #{tpu_custom_call.1}
  #allocation0 [shape = 'u32[]', space=smem, size = 0x4, offset = 0x4, fixed_abs, tag = 'smem constant byte address 0x4 - core index']
  #allocation1 [shape = 'u32[144,128]{1,0:T(1,128)}', space=vmem, size = 0x12000, scoped, tag = 'internal scratch']
  %s0 = inlined_call_operand.vmem [shape: bf16[96,32], index: 0, kind: input, shape index: {}]
  %s1 = inlined_call_operand.vmem [shape: bf16[32,128], index: 1, kind: input, shape index: {}]
  %s2 = inlined_call_operand.vmem [shape: f32[8,128], index: 2, kind: input, shape index: {}]
  %s3 = inlined_call_operand.vmem [shape: s32[96,8], index: 3, kind: input, shape index: {}]
  %s4 = inlined_call_operand.hbm [shape: bf16[96,128], index: 4, kind: output, shape index: {0}]
  %s5 = inlined_call_operand.hbm [shape: f32[96,128], index: 5, kind: output, shape index: {1}]
  %6 = xla_tuple %s4, %s5
  %s7 = sld [smem:[#allocation0]]
  $region61: #{tpu_custom_call.1} parent=0
    _
  %s9 = ssub.s32 1, %s7
  %s10 = scalar_select 0, %s9, %s7
  $region1: #{tpu_custom_call.1} parent=0
    #allocation2 [shape = 'u8[24576]{0}', space=vmem, size = 0x6000, scoped, tag = 'output window, operand 0']
    #allocation3 [shape = 's32[2]{0}', space=sflag, size = 0x8, scoped, tag = 'scoped memory for tpu_custom_call.1']
    #allocation4 [shape = 'u8[49152]{0}', space=vmem, size = 0xc000, scoped, tag = 'output window, operand 1']
    #allocation5 [shape = 's32[2]{0}', space=sflag, size = 0x8, scoped, tag = 'scoped memory for tpu_custom_call.1']
    %11 = vsyncpa [#allocation3], 0
    %s12 = scalar_lea.sflag [#allocation3], 1
    %13 = vsyncpa %s12, 0
    %14 = vsyncpa [#allocation5], 0
    %s15 = scalar_lea.sflag [#allocation5], 1
    %16 = vsyncpa %s15, 0
    loop: start=0, step=1, limit=4
    $region2: #{tpu_custom_call.1} parent=1 // loop_pre_header
      _
    $region3: #{tpu_custom_call.1} parent=1 // loop_header
      %s18 = sphi 0, %s22
      %p19 = scmp.ge.s32.totalorder %s18, 4
      %s28 = sphi 0, %s30
      %s31 = sphi 0, %s28
      %s32 = sphi 0, %s31
      %s48 = sphi 0, %s32
      %s52 = sphi 0, %s52
      %s54 = sphi 0, %s52
      %s55 = sphi 0, %s54
      %s69 = sphi 0, %s55
      %s73 = sphi 0, %s73
      %s75 = sphi 0, %s73
      %s76 = sphi 0, %s75
      %s90 = sphi 0, %s76
      %s96 = sphi 0, %s98
      %s99 = sphi 0, %s96
      %s100 = sphi 0, %s99
      %s116 = sphi 0, %s100
      %s122 = sphi 0, %s124
      %s125 = sphi 0, %s122
      %s126 = sphi 0, %s125
      %s142 = sphi 0, %s126
      %s148 = sphi 0, %s150
      %s151 = sphi 0, %s148
      %s152 = sphi 0, %s151
      %s168 = sphi 0, %s152
    $region4: #{tpu_custom_call.1} parent=1 // loop_header_branch
      %21 = sbr.rel (%p19) target = $region8
    $region5: #{tpu_custom_call.1} parent=1 // loop_body
      %s23 = ssub.s32 %s18, 1
      %s24 = ssub.s32 %s18, 2
      %s25 = sadd.s32 %s18, 1
      %s26 = ssub.s32 %s18, %s25
      %p27 = scmp.eq.s32.totalorder %s26, 0
      %s29 = sadd.s32 %s28, 1
      %s30 = scalar_select %p27, %s28, %s29
      %p33 = pneg %p27
      %p34 = scmp.eq.s32.totalorder %s18, 1
      %p35 = por %p33, %p34
      %p36 = scmp.ne.s32.totalorder %s28, %s31
      %p37 = scmp.eq.s32.totalorder %s18, 0
      %p38 = por %p36, %p37
      %p39 = scmp.ne.s32.totalorder %s28, %s31
      %p40 = scmp.eq.s32.totalorder %s23, 1
      %p41 = por %p39, %p40
      %p42 = scmp.ne.s32.totalorder %s31, %s32
      %p43 = scmp.eq.s32.totalorder %s23, 0
      %p44 = por %p42, %p43
      %p45 = scmp.ne.s32.totalorder %s31, %s32
      %p46 = scmp.eq.s32.totalorder %s24, 1
      %p47 = por %p45, %p46
      %p49 = scmp.ne.s32.totalorder %s32, %s48
      %p50 = scmp.eq.s32.totalorder %s24, 0
      %p51 = por %p49, %p50
      %s53 = sadd.s32 %s52, 1
      %p56 = scmp.eq.s32.totalorder %s18, 1
      %p57 = scmp.ne.s32.totalorder %s52, %s54
      %p58 = scmp.eq.s32.totalorder %s18, 0
      %p59 = por %p57, %p58
      %p60 = scmp.ne.s32.totalorder %s52, %s54
      %p61 = scmp.eq.s32.totalorder %s23, 1
      %p62 = por %p60, %p61
      %p63 = scmp.ne.s32.totalorder %s54, %s55
      %p64 = scmp.eq.s32.totalorder %s23, 0
      %p65 = por %p63, %p64
      %p66 = scmp.ne.s32.totalorder %s54, %s55
      %p67 = scmp.eq.s32.totalorder %s24, 1
      %p68 = por %p66, %p67
      %p70 = scmp.ne.s32.totalorder %s55, %s69
      %p71 = scmp.eq.s32.totalorder %s24, 0
      %p72 = por %p70, %p71
      %s74 = sadd.s32 %s73, 1
      %p77 = scmp.eq.s32.totalorder %s18, 1
      %p78 = scmp.ne.s32.totalorder %s73, %s75
      %p79 = scmp.eq.s32.totalorder %s18, 0
      %p80 = por %p78, %p79
      %p81 = scmp.ne.s32.totalorder %s73, %s75
      %p82 = scmp.eq.s32.totalorder %s23, 1
      %p83 = por %p81, %p82
      %p84 = scmp.ne.s32.totalorder %s75, %s76
      %p85 = scmp.eq.s32.totalorder %s23, 0
      %p86 = por %p84, %p85
      %p87 = scmp.ne.s32.totalorder %s75, %s76
      %p88 = scmp.eq.s32.totalorder %s24, 1
      %p89 = por %p87, %p88
      %p91 = scmp.ne.s32.totalorder %s76, %s90
      %p92 = scmp.eq.s32.totalorder %s24, 0
      %p93 = por %p91, %p92
      %s94 = ssub.s32 %s18, %s25
      %p95 = scmp.eq.s32.totalorder %s94, 0
      %s97 = sadd.s32 %s96, 1
      %s98 = scalar_select %p95, %s96, %s97
      %p101 = pneg %p95
      %p102 = scmp.eq.s32.totalorder %s18, 1
      %p103 = por %p101, %p102
      %p104 = scmp.ne.s32.totalorder %s96, %s99
      %p105 = scmp.eq.s32.totalorder %s18, 0
      %p106 = por %p104, %p105
      %p107 = scmp.ne.s32.totalorder %s96, %s99
      %p108 = scmp.eq.s32.totalorder %s23, 1
      %p109 = por %p107, %p108
      %p110 = scmp.ne.s32.totalorder %s99, %s100
      %p111 = scmp.eq.s32.totalorder %s23, 0
      %p112 = por %p110, %p111
      %p113 = scmp.ne.s32.totalorder %s99, %s100
      %p114 = scmp.eq.s32.totalorder %s24, 1
      %p115 = por %p113, %p114
      %p117 = scmp.ne.s32.totalorder %s100, %s116
      %p118 = scmp.eq.s32.totalorder %s24, 0
      %p119 = por %p117, %p118
      %s120 = ssub.s32 %s18, %s25
      %p121 = scmp.eq.s32.totalorder %s120, 0
      %s123 = sadd.s32 %s122, 1
      %s124 = scalar_select %p121, %s122, %s123
      %p127 = pneg %p121
      %p128 = scmp.eq.s32.totalorder %s18, 1
      %p129 = por %p127, %p128
      %p130 = scmp.ne.s32.totalorder %s122, %s125
      %p131 = scmp.eq.s32.totalorder %s18, 0
      %p132 = por %p130, %p131
      %p133 = scmp.ne.s32.totalorder %s122, %s125
      %p134 = scmp.eq.s32.totalorder %s23, 1
      %p135 = por %p133, %p134
      %p136 = scmp.ne.s32.totalorder %s125, %s126
      %p137 = scmp.eq.s32.totalorder %s23, 0
      %p138 = por %p136, %p137
      %p139 = scmp.ne.s32.totalorder %s125, %s126
      %p140 = scmp.eq.s32.totalorder %s24, 1
      %p141 = por %p139, %p140
      %p143 = scmp.ne.s32.totalorder %s126, %s142
      %p144 = scmp.eq.s32.totalorder %s24, 0
      %p145 = por %p143, %p144
      %s146 = ssub.s32 %s18, %s25
      %p147 = scmp.eq.s32.totalorder %s146, 0
      %s149 = sadd.s32 %s148, 1
      %s150 = scalar_select %p147, %s148, %s149
      %p153 = pneg %p147
      %p154 = scmp.eq.s32.totalorder %s18, 1
      %p155 = por %p153, %p154
      %p156 = scmp.ne.s32.totalorder %s148, %s151
      %p157 = scmp.eq.s32.totalorder %s18, 0
      %p158 = por %p156, %p157
      %p159 = scmp.ne.s32.totalorder %s148, %s151
      %p160 = scmp.eq.s32.totalorder %s23, 1
      %p161 = por %p159, %p160
      %p162 = scmp.ne.s32.totalorder %s151, %s152
      %p163 = scmp.eq.s32.totalorder %s23, 0
      %p164 = por %p162, %p163
      %p165 = scmp.ne.s32.totalorder %s151, %s152
      %p166 = scmp.eq.s32.totalorder %s24, 1
      %p167 = por %p165, %p166
      %p169 = scmp.ne.s32.totalorder %s152, %s168
      %p170 = scmp.eq.s32.totalorder %s24, 0
      %p171 = por %p169, %p170
      %p172 = scmp.le.s32.totalorder 1, %s18
      %p173 = scmp.lt.s32.totalorder %s18, 3
      %p174 = pnand %p172, %p173
      %p175 = pneg %p174
      // Predicated region
      $region9: #{tpu_custom_call.1} parent=5 // pred_check
        _
      $region10: #{tpu_custom_call.1} parent=5 // pred_check_branch
        %177 = sbr.rel (%p174) target = $region12
      $region11: #{tpu_custom_call.1} parent=5 // pred_region
        %s178 = ssub.s32 %s18, 1
        // Predicated region
        $region13: #{tpu_custom_call.1} parent=11 // pred_check
          %p179 = pneg %p65
        $region14: #{tpu_custom_call.1} parent=11 // pred_check_branch
          %181 = sbr.rel (%p179) target = $region16
        $region15: #{tpu_custom_call.1} parent=11 // pred_region
          _
        $region16: #{tpu_custom_call.1} parent=11 // pred_fallthru
          _
        // Predicated region
        $region17: #{tpu_custom_call.1} parent=11 // pred_check
          %p182 = pneg %p86
        $region18: #{tpu_custom_call.1} parent=11 // pred_check_branch
          %184 = sbr.rel (%p182) target = $region20
        $region19: #{tpu_custom_call.1} parent=11 // pred_region
          _
        $region20: #{tpu_custom_call.1} parent=11 // pred_fallthru
          _
      $region12: #{tpu_custom_call.1} parent=5 // pred_fallthru
        _
      %p185 = scmp.lt.s32.totalorder %s18, 2
      // Predicated region
      $region21: #{tpu_custom_call.1} parent=5 // pred_check
        %p186 = pneg %p185
      $region22: #{tpu_custom_call.1} parent=5 // pred_check_branch
        %188 = sbr.rel (%p186) target = $region24
      $region23: #{tpu_custom_call.1} parent=5 // pred_region
        // Predicated region
        $region25: #{tpu_custom_call.1} parent=23 // pred_check
          %p189 = pneg %p38
        $region26: #{tpu_custom_call.1} parent=23 // pred_check_branch
          %191 = sbr.rel (%p189) target = $region28
        $region27: #{tpu_custom_call.1} parent=23 // pred_region
          %s192 = smul.u32 6, %s18
          %p193 = scmp.lt.s32.totalorder %s192, 11
          %s194 = scalar_select %p193, %s192, 11
          %s195 = smul.addr %s194, 4
          %s196 = scalar_lea.vmem %s0, %s195
          %s197 = smul.u32 6, %s18
        $region28: #{tpu_custom_call.1} parent=23 // pred_fallthru
          _
        // Predicated region
        $region29: #{tpu_custom_call.1} parent=23 // pred_check
          %p198 = pneg %p106
        $region30: #{tpu_custom_call.1} parent=23 // pred_check_branch
          %200 = sbr.rel (%p198) target = $region32
        $region31: #{tpu_custom_call.1} parent=23 // pred_region
          %s201 = smul.u32 6, %s18
          %p202 = scmp.lt.s32.totalorder %s201, 11
          %s203 = scalar_select %p202, %s201, 11
          %s204 = smul.addr %s203, 8
          %s205 = scalar_lea.vmem %s3, %s204
          %s206 = smul.u32 6, %s18
        $region32: #{tpu_custom_call.1} parent=23 // pred_fallthru
          _
      $region24: #{tpu_custom_call.1} parent=5 // pred_fallthru
        _
      %p207 = scmp.le.s32.totalorder 1, %s18
      %p208 = scmp.lt.s32.totalorder %s18, 3
      %p209 = pnand %p207, %p208
      %p210 = pneg %p209
      // Predicated region
      $region33: #{tpu_custom_call.1} parent=5 // pred_check
        _
      $region34: #{tpu_custom_call.1} parent=5 // pred_check_branch
        %212 = sbr.rel (%p209) target = $region36
      $region35: #{tpu_custom_call.1} parent=5 // pred_region
        %s213 = ssub.s32 %s18, 1
        %s214 = smul.u32 6, %s23
        %p215 = scmp.lt.s32.totalorder %s214, 11
        %s216 = scalar_select %p215, %s214, 11
        %s217 = smul.addr %s216, 4
        %s218 = scalar_lea.vmem %s0, %s217
        %p219 = pneg %p44
        %p220 = pneg %p41
        %p221 = pneg %p65
        %p222 = pneg %p62
        %p223 = pneg %p86
        %p224 = pneg %p83
        %s225 = smul.u32 6, %s23
        %p226 = scmp.lt.s32.totalorder %s225, 11
        %s227 = scalar_select %p226, %s225, 11
        %s228 = smul.addr %s227, 8
        %s229 = scalar_lea.vmem %s3, %s228
        %p230 = pneg %p112
        %p231 = pneg %p109
        %p232 = pneg %p138
        %p233 = pneg %p135
        %s234 = sand.u32 %s125, 1
        %s235 = scalar_lea.sflag [#allocation3], %s234
        %s236 = sand.u32 %s125, 1
        %s237 = smul.addr %s236, 24
        %s238 = scalar_lea.vmem [#allocation2], %s237
        %p239 = pneg %p164
        %p240 = pneg %p161
        %s241 = sand.u32 %s151, 1
        %s242 = scalar_lea.sflag [#allocation5], %s241
        %s243 = sand.u32 %s151, 1
        %s244 = smul.addr %s243, 48
        %s245 = scalar_lea.vmem [#allocation4], %s244
        %s246 = smul.u32 6, %s23
        %p247 = scmp.lt.s32.totalorder %s246, 11
        %s248 = scalar_select %p247, %s246, 11
        %s249 = smul.addr %s248, 4
        %s250 = scalar_lea.vmem %s0, %s249
        %s251 = smul.u32 6, %s23
        %s252 = smul.u32 6, %s23
        %p253 = scmp.lt.s32.totalorder %s252, 11
        %s254 = scalar_select %p253, %s252, 11
        %s255 = smul.addr %s254, 8
        %s256 = scalar_lea.vmem %s3, %s255
        %s257 = smul.u32 6, %s23
        %s258 = smul.u32 6, %s23
        %s259 = smul.u32 6, %s23
        %s261 = smul.u32 %s23, 48
        %p262 = scmp.lt.s32.totalorder %s261, 64
        // Predicated region
        $region37: #{tpu_custom_call.1} parent=35 // pred_check
          %p263 = pneg %p262
        $region38: #{tpu_custom_call.1} parent=35 // pred_check_branch
          %265 = sbr.rel (%p263) target = $region40
        $region39: #{tpu_custom_call.1} parent=35 // pred_region
          %v266 = vld [vmem:[%s250] sm:$0xf]
          %v267 = vld [vmem:[%s250 + $0x4] sm:$0xf]
          %v268 = vld [vmem:[%s250 + $0x8] sm:$0xf]
          %v269 = vld [vmem:[%s250 + $0xc] sm:$0xf]
          %v270 = vld [vmem:[%s250 + $0x10] sm:$0xf]
          %v271 = vld [vmem:[%s250 + $0x14] sm:$0xf]
          %v272 = vld [vmem:[%s1] sm:$0xf]
          %v273 = vld [vmem:[%s1 + $0x4] sm:$0xf]
          %v274 = vld [vmem:[%s1 + $0x8] sm:$0xf]
          %v275 = vld [vmem:[%s1 + $0xc] sm:$0xf]
          %v276 = vld [vmem:[%s2] sm:$0x1]
          %v277 = vlaneseq
          %v278 = vshrl.u32 %v277, 7
          %v279 = vsub.s32 0, %v278
          %v280 = vrot.slane %v276, %v279
          %v287 = vunpack.c.l.b16 %v266
          %v288 = vunpack.c.l.b16 %v267
          %v289 = vunpack.c.l.b16 %v268
          %v290 = vunpack.c.l.b16 %v269
          %v291 = vunpack.c.l.b16 %v270
          %v292 = vunpack.c.l.b16 %v271
          %v293 = vpack.c.b16 %v288, %v287
          %v294 = vpack.c.b16 %v290, %v289
          %v295 = vpack.c.b16 %v292, %v291
          %v300 = vunpack.c.l.b16 %v272
          %v301 = vunpack.c.l.b16 %v273
          %v302 = vunpack.c.l.b16 %v274
          %v303 = vunpack.c.l.b16 %v275
          %v304 = vpack.c.b16 %v301, %v300
          %v305 = vpack.c.b16 %v303, %v302
          %vm308 = vcmask 261120
          %v310 = vsel %vm308, %v293, 0
          %v313 = vsel %vm308, %v294, 0
          %v316 = vsel %vm308, %v295, 0
          %318 = vmatprep.subr.bf16.mxu0 0
          %319 = vmatpush1.bf16.msra.mxu0 %v304
          %320 = vmatprep.subr.bf16.mxu0 0
          %321 = vmatpush1.bf16.msra.mxu0 %v305
          %322 = vmatprep.subr.bf16.mxu0 0
          %323 = vmatpush1.bf16.msra.mxu0 0
          %324 = vmatprep.subr.bf16.mxu0 0
          %325 = vmatpush1.bf16.msra.mxu0 0
          %326 = vmatprep.subr.bf16.mxu0 0
          %327 = vmatpush1.bf16.msra.mxu0 0
          %328 = vmatprep.subr.bf16.mxu0 0
          %329 = vmatpush1.bf16.msra.mxu0 0
          %330 = vmatprep.subr.bf16.mxu0 0
          %331 = vmatpush1.bf16.msra.mxu0 0
          %332 = vmatprep.subr.bf16.mxu0 0
          %333 = vmatpush1.bf16.msra.mxu0 0
          %334 = vmatprep.subr.bf16.mxu0 0
          %335 = vmatpush1.bf16.msra.mxu0 0
          %336 = vmatprep.subr.bf16.mxu0 0
          %337 = vmatpush1.bf16.msra.mxu0 0
          %338 = vmatprep.subr.bf16.mxu0 0
          %339 = vmatpush1.bf16.msra.mxu0 0
          %340 = vmatprep.subr.bf16.mxu0 0
          %341 = vmatpush1.bf16.msra.mxu0 0
          %342 = vmatprep.subr.bf16.mxu0 0
          %343 = vmatpush1.bf16.msra.mxu0 0
          %344 = vmatprep.subr.bf16.mxu0 0
          %345 = vmatpush1.bf16.msra.mxu0 0
          %346 = vmatprep.subr.bf16.mxu0 0
          %347 = vmatpush1.bf16.msra.mxu0 0
          %348 = vmatprep.subr.bf16.mxu0 0
          %349 = vmatpush1.bf16.msra.mxu0 0
          %350 = vmatprep.mubr.bf16.mxu0 0
          %351 = vmatmul.mubr.bf16.gmra.mrb[0].mxu0 %v310
          %v352 = vpop.f32.mrb[0].mxu0
          %v353 = vadd.f32 %v280, %v352
          %v354 = vpop.f32.mrb[0].mxu0
          %v355 = vpop.f32.mrb[0].mxu0
          %v356 = vadd.f32 %v280, %v355
          %v357 = vpop.f32.mrb[0].mxu0
          %358 = vmatprep.mubr.bf16.mxu0 0
          %359 = vmatmul.mubr.bf16.gmra.mrb[0].mxu0 %v313
          %v360 = vpop.f32.mrb[0].mxu0
          %v361 = vadd.f32 %v280, %v360
          %v362 = vpop.f32.mrb[0].mxu0
          %v363 = vpop.f32.mrb[0].mxu0
          %v364 = vadd.f32 %v280, %v363
          %v365 = vpop.f32.mrb[0].mxu0
          %366 = vmatprep.mubr.bf16.mxu0 0
          %367 = vmatmul.mubr.bf16.gmra.mrb[0].mxu0 %v316
          %v368 = vpop.f32.mrb[0].mxu0
          %v369 = vadd.f32 %v280, %v368
          %v370 = vpop.f32.mrb[0].mxu0
          %v371 = vpop.f32.mrb[0].mxu0
          %v372 = vadd.f32 %v280, %v371
          %v373 = vpop.f32.mrb[0].mxu0
          %374 = vdwg.mxu0
          %375 = vadd.xlane.f32.xlu0 %v353
          %v376 = vpop.xlane.xlu0 %375
          %377 = vadd.xlane.f32.xlu0 %v356
          %v378 = vpop.xlane.xlu0 %377
          %379 = vadd.xlane.f32.xlu0 %v361
          %v380 = vpop.xlane.xlu0 %379
          %381 = vadd.xlane.f32.xlu0 %v364
          %v382 = vpop.xlane.xlu0 %381
          %383 = vadd.xlane.f32.xlu0 %v369
          %v384 = vpop.xlane.xlu0 %383
          %385 = vadd.xlane.f32.xlu0 %v372
          %v386 = vpop.xlane.xlu0 %385
          %v387 = vmul.f32 %v376, 0.015625
          %v388 = vmul.f32 %v378, 0.015625
          %v389 = vmul.f32 %v380, 0.015625
          %v390 = vmul.f32 %v382, 0.015625
          %v391 = vmul.f32 %v384, 0.015625
          %v392 = vmul.f32 %v386, 0.015625
          %v393 = vsub.f32 %v353, %v387
          %v394 = vsub.f32 %v356, %v388
          %v395 = vsub.f32 %v361, %v389
          %v396 = vsub.f32 %v364, %v390
          %v397 = vsub.f32 %v369, %v391
          %v398 = vsub.f32 %v372, %v392
          %v399 = vmul.f32 %v393, %v393
          %v400 = vmul.f32 %v394, %v394
          %v401 = vmul.f32 %v395, %v395
          %v402 = vmul.f32 %v396, %v396
          %v403 = vmul.f32 %v397, %v397
          %v404 = vmul.f32 %v398, %v398
          %405 = vadd.xlane.f32.xlu0 %v399
          %v406 = vpop.xlane.xlu0 %405
          %407 = vadd.xlane.f32.xlu0 %v400
          %v408 = vpop.xlane.xlu0 %407
          %409 = vadd.xlane.f32.xlu0 %v401
          %v410 = vpop.xlane.xlu0 %409
          %411 = vadd.xlane.f32.xlu0 %v402
          %v412 = vpop.xlane.xlu0 %411
          %413 = vadd.xlane.f32.xlu0 %v403
          %v414 = vpop.xlane.xlu0 %413
          %415 = vadd.xlane.f32.xlu0 %v404
          %v416 = vpop.xlane.xlu0 %415
          %v417 = vmul.f32 %v387, 64.0
          %v418 = vmul.f32 %v388, 64.0
          %v419 = vmul.f32 %v389, 64.0
          %v420 = vmul.f32 %v390, 64.0
          %v421 = vmul.f32 %v391, 64.0
          %v422 = vmul.f32 %v392, 64.0
          %v423 = vmul.f32 %v417, %v387
          %v424 = vmul.f32 %v418, %v388
          %v425 = vmul.f32 %v419, %v389
          %v426 = vmul.f32 %v420, %v390
          %v427 = vmul.f32 %v421, %v391
          %v428 = vmul.f32 %v422, %v392
          %v429 = vsub.f32 %v406, %v423
          %v430 = vsub.f32 %v408, %v424
          %v431 = vsub.f32 %v410, %v425
          %v432 = vsub.f32 %v412, %v426
          %v433 = vsub.f32 %v414, %v427
          %v434 = vsub.f32 %v416, %v428
          %v435 = vmul.f32 %v429, 0.015625
          %v436 = vmul.f32 %v430, 0.015625
          %v437 = vmul.f32 %v431, 0.015625
          %v438 = vmul.f32 %v432, 0.015625
          %v439 = vmul.f32 %v433, 0.015625
          %v440 = vmul.f32 %v434, 0.015625
          %v441 = vadd.f32 %v435, 1e-05
          %v442 = vadd.f32 %v436, 1e-05
          %v443 = vadd.f32 %v437, 1e-05
          %v444 = vadd.f32 %v438, 1e-05
          %v445 = vadd.f32 %v439, 1e-05
          %v446 = vadd.f32 %v440, 1e-05
          %v447 = vrsqrt.pop %v441
          %v448 = vrsqrt.pop %v442
          %v449 = vrsqrt.pop %v443
          %v450 = vrsqrt.pop %v444
          %v451 = vrsqrt.pop %v445
          %v452 = vrsqrt.pop %v446
          %v453 = vmul.f32 %v393, %v447
          %v454 = vmul.f32 %v394, %v448
          %v455 = vmul.f32 %v395, %v449
          %v456 = vmul.f32 %v396, %v450
          %v457 = vmul.f32 %v397, %v451
          %v458 = vmul.f32 %v398, %v452
          %v459 = vld [vmem:[%s2 + $0x1] sm:$0x1]
          %v460 = vlaneseq
          %v461 = vshrl.u32 %v460, 7
          %v462 = vsub.s32 0, %v461
          %v463 = vrot.slane %v459, %v462
          %v464 = vmul.f32 %v453, %v463
          %v465 = vmul.f32 %v454, %v463
          %v466 = vmul.f32 %v455, %v463
          %v467 = vmul.f32 %v456, %v463
          %v468 = vmul.f32 %v457, %v463
          %v469 = vmul.f32 %v458, %v463
          %v470 = vld [vmem:[%s2 + $0x2] sm:$0x1]
          %v471 = vlaneseq
          %v472 = vshrl.u32 %v471, 7
          %v473 = vsub.s32 0, %v472
          %v474 = vrot.slane %v470, %v473
          %v475 = vadd.f32 %v464, %v474
          %v476 = vadd.f32 %v465, %v474
          %v477 = vadd.f32 %v466, %v474
          %v478 = vadd.f32 %v467, %v474
          %v479 = vadd.f32 %v468, %v474
          %v480 = vadd.f32 %v469, %v474
          %v481 = vmul.f32 %v475, 0.5
          %v482 = vmul.f32 %v476, 0.5
          %v483 = vmul.f32 %v477, 0.5
          %v484 = vmul.f32 %v478, 0.5
          %v485 = vmul.f32 %v479, 0.5
          %v486 = vmul.f32 %v480, 0.5
          %v487 = vmul.f32 %v475, 0.044715
          %v488 = vmul.f32 %v476, 0.044715
          %v489 = vmul.f32 %v477, 0.044715
          %v490 = vmul.f32 %v478, 0.044715
          %v491 = vmul.f32 %v479, 0.044715
          %v492 = vmul.f32 %v480, 0.044715
          %v493 = vmul.f32 %v487, %v475
          %v494 = vmul.f32 %v488, %v476
          %v495 = vmul.f32 %v489, %v477
          %v496 = vmul.f32 %v490, %v478
          %v497 = vmul.f32 %v491, %v479
          %v498 = vmul.f32 %v492, %v480
          %v499 = vmul.f32 %v493, %v475
          %v500 = vmul.f32 %v494, %v476
          %v501 = vmul.f32 %v495, %v477
          %v502 = vmul.f32 %v496, %v478
          %v503 = vmul.f32 %v497, %v479
          %v504 = vmul.f32 %v498, %v480
          %v505 = vadd.f32 %v475, %v499
          %v506 = vadd.f32 %v476, %v500
          %v507 = vadd.f32 %v477, %v501
          %v508 = vadd.f32 %v478, %v502
          %v509 = vadd.f32 %v479, %v503
          %v510 = vadd.f32 %v480, %v504
          %v511 = vmul.f32 %v505, 0.7978846
          %v512 = vmul.f32 %v506, 0.7978846
          %v513 = vmul.f32 %v507, 0.7978846
          %v514 = vmul.f32 %v508, 0.7978846
          %v515 = vmul.f32 %v509, 0.7978846
          %v516 = vmul.f32 %v510, 0.7978846
          %v517 = vtanh.pop %v511
          %v518 = vtanh.pop %v512
          %v519 = vtanh.pop %v513
          %v520 = vtanh.pop %v514
          %v521 = vtanh.pop %v515
          %v522 = vtanh.pop %v516
          %v523 = vadd.f32 %v517, 1.0
          %v524 = vadd.f32 %v518, 1.0
          %v525 = vadd.f32 %v519, 1.0
          %v526 = vadd.f32 %v520, 1.0
          %v527 = vadd.f32 %v521, 1.0
          %v528 = vadd.f32 %v522, 1.0
          %v529 = vmul.f32 %v481, %v523
          %v530 = vmul.f32 %v482, %v524
          %v531 = vmul.f32 %v483, %v525
          %v532 = vmul.f32 %v484, %v526
          %v533 = vmul.f32 %v485, %v527
          %v534 = vmul.f32 %v486, %v528
          %v535 = vpack.c.bf16 %v530, %v529
          %v536 = vpack.c.bf16 %v532, %v531
          %v537 = vpack.c.bf16 %v534, %v533
          %v541 = vunpack.c.l.b16 %v535
          %v542 = vunpack.c.h.b16 %v535
          %v543 = vunpack.c.l.b16 %v536
          %v544 = vunpack.c.h.b16 %v536
          %v545 = vunpack.c.l.b16 %v537
          %v546 = vunpack.c.h.b16 %v537
          %v547 = vpack.c.b16 %v541, %v541
          %v548 = vpack.c.b16 %v542, %v542
          %v549 = vpack.c.b16 %v543, %v543
          %v550 = vpack.c.b16 %v544, %v544
          %v551 = vpack.c.b16 %v545, %v545
          %v552 = vpack.c.b16 %v546, %v546
          %559 = vst [vmem:[%s238] sm:$0xf] %v547
          %560 = vst [vmem:[%s238 + $0x4] sm:$0xf] %v548
          %561 = vst [vmem:[%s238 + $0x8] sm:$0xf] %v549
          %562 = vst [vmem:[%s238 + $0xc] sm:$0xf] %v550
          %563 = vst [vmem:[%s238 + $0x10] sm:$0xf] %v551
          %564 = vst [vmem:[%s238 + $0x14] sm:$0xf] %v552
        $region40: #{tpu_custom_call.1} parent=35 // pred_fallthru
          _
        %v565 = vld [vmem:[%s256] sm:$0xff]
        %v566 = vld [vmem:[%s256 + $0x8] sm:$0xff]
        %v567 = vld [vmem:[%s256 + $0x10] sm:$0xff]
        %v568 = vld [vmem:[%s256 + $0x18] sm:$0xff]
        %v569 = vld [vmem:[%s256 + $0x20] sm:$0xff]
        %v570 = vld [vmem:[%s256 + $0x28] sm:$0xff]
        %v571 = vcvt.s32.f32 %v565
        %v572 = vcvt.s32.f32 %v566
        %v573 = vcvt.s32.f32 %v567
        %v574 = vcvt.s32.f32 %v568
        %v575 = vcvt.s32.f32 %v569
        %v576 = vcvt.s32.f32 %v570
        %v577 = vld [vmem:[%s2 + $0x3] sm:$0x1]
        %579 = vset.pattern.permute.xlu0 0
        %580 = vperm.xlu0 %579, %v571
        %v581 = vpop.permute.xlu0 %580
        %584 = vset.pattern.permute.xlu0 0
        %585 = vperm.xlu0 %584, %v572
        %v586 = vpop.permute.xlu0 %585
        %589 = vset.pattern.permute.xlu0 0
        %590 = vperm.xlu0 %589, %v573
        %v591 = vpop.permute.xlu0 %590
        %594 = vset.pattern.permute.xlu0 0
        %595 = vperm.xlu0 %594, %v574
        %v596 = vpop.permute.xlu0 %595
        %599 = vset.pattern.permute.xlu0 0
        %600 = vperm.xlu0 %599, %v575
        %v601 = vpop.permute.xlu0 %600
        %604 = vset.pattern.permute.xlu0 0
        %605 = vperm.xlu0 %604, %v576
        %v606 = vpop.permute.xlu0 %605
        %v608 = vlaneseq
        %v609 = vshrl.u32 %v608, 7
        %v610 = vsub.s32 0, %v609
        %v611 = vrot.slane %v577, %v610
        %v612 = vmul.f32 %v581, %v611
        %v613 = vmul.f32 %v586, %v611
        %v614 = vmul.f32 %v591, %v611
        %v615 = vmul.f32 %v596, %v611
        %v616 = vmul.f32 %v601, %v611
        %v617 = vmul.f32 %v606, %v611
        %v618 = vld [vmem:[%s2 + $0x4] sm:$0x1]
        %619 = vset.pattern.permute.xlu0 1
        %620 = vperm.xlu0 %619, %v571
        %v621 = vpop.permute.xlu0 %620
        %623 = vset.pattern.permute.xlu0 1
        %624 = vperm.xlu0 %623, %v572
        %v625 = vpop.permute.xlu0 %624
        %627 = vset.pattern.permute.xlu0 1
        %628 = vperm.xlu0 %627, %v573
        %v629 = vpop.permute.xlu0 %628
        %631 = vset.pattern.permute.xlu0 1
        %632 = vperm.xlu0 %631, %v574
        %v633 = vpop.permute.xlu0 %632
        %635 = vset.pattern.permute.xlu0 1
        %636 = vperm.xlu0 %635, %v575
        %v637 = vpop.permute.xlu0 %636
        %639 = vset.pattern.permute.xlu0 1
        %640 = vperm.xlu0 %639, %v576
        %v641 = vpop.permute.xlu0 %640
        %v643 = vlaneseq
        %v644 = vshrl.u32 %v643, 7
        %v645 = vsub.s32 0, %v644
        %v646 = vrot.slane %v618, %v645
        %v647 = vmul.f32 %v621, %v646
        %v648 = vmul.f32 %v625, %v646
        %v649 = vmul.f32 %v629, %v646
        %v650 = vmul.f32 %v633, %v646
        %v651 = vmul.f32 %v637, %v646
        %v652 = vmul.f32 %v641, %v646
        %v653 = vadd.f32 %v612, %v647
        %v654 = vadd.f32 %v613, %v648
        %v655 = vadd.f32 %v614, %v649
        %v656 = vadd.f32 %v615, %v650
        %v657 = vadd.f32 %v616, %v651
        %v658 = vadd.f32 %v617, %v652
        %v659 = vld [vmem:[%s2 + $0x5] sm:$0x1]
        %660 = vset.pattern.permute.xlu0 2
        %661 = vperm.xlu0 %660, %v571
        %v662 = vpop.permute.xlu0 %661
        %664 = vset.pattern.permute.xlu0 2
        %665 = vperm.xlu0 %664, %v572
        %v666 = vpop.permute.xlu0 %665
        %668 = vset.pattern.permute.xlu0 2
        %669 = vperm.xlu0 %668, %v573
        %v670 = vpop.permute.xlu0 %669
        %672 = vset.pattern.permute.xlu0 2
        %673 = vperm.xlu0 %672, %v574
        %v674 = vpop.permute.xlu0 %673
        %676 = vset.pattern.permute.xlu0 2
        %677 = vperm.xlu0 %676, %v575
        %v678 = vpop.permute.xlu0 %677
        %680 = vset.pattern.permute.xlu0 2
        %681 = vperm.xlu0 %680, %v576
        %v682 = vpop.permute.xlu0 %681
        %v684 = vlaneseq
        %v685 = vshrl.u32 %v684, 7
        %v686 = vsub.s32 0, %v685
        %v687 = vrot.slane %v659, %v686
        %v688 = vmul.f32 %v662, %v687
        %v689 = vmul.f32 %v666, %v687
        %v690 = vmul.f32 %v670, %v687
        %v691 = vmul.f32 %v674, %v687
        %v692 = vmul.f32 %v678, %v687
        %v693 = vmul.f32 %v682, %v687
        %v694 = vadd.f32 %v653, %v688
        %v695 = vadd.f32 %v654, %v689
        %v696 = vadd.f32 %v655, %v690
        %v697 = vadd.f32 %v656, %v691
        %v698 = vadd.f32 %v657, %v692
        %v699 = vadd.f32 %v658, %v693
        %v700 = vld [vmem:[%s2 + $0x6] sm:$0x1]
        %v701 = vlaneseq
        %v702 = vshrl.u32 %v701, 7
        %v703 = vsub.s32 0, %v702
        %v704 = vrot.slane %v700, %v703
        %v705 = vadd.f32 %v694, %v704
        %v706 = vadd.f32 %v695, %v704
        %v707 = vadd.f32 %v696, %v704
        %v708 = vadd.f32 %v697, %v704
        %v709 = vadd.f32 %v698, %v704
        %v710 = vadd.f32 %v699, %v704
        %v711 = vand.u32 2147483647, %v705
        %vm712 = vcmp.le.f32.partialorder %v711, 0.7853982
        %vm713 = vcmp.lt.s32.totalorder %v705, 0
        %v714 = vand.u32 %v705, 2139095040
        %v715 = vshrl.u32 %v714, 23
        %v716 = vsub.s32 %v715, 127
        %v717 = vand.u32 2147483647, %v705
        %v718 = vand.u32 %v717, 8388607
        %v719 = vor.u32 %v718, 8388608
        %v720 = vsub.s32 0, %v719
        %v721 = vadd.s32 %v716, 1
        %vm722 = vcmp.gt.s32.totalorder %v721, 0
        %v723 = vsel %vm722, %v721, 0
        %v724 = vshrl.u32 %v723, 5
        %v725 = vand.u32 %v723, 31
        %v726 = vsub.s32 32, %v725
        %v727 = vshrl.u32 683565275, %v726
        %v728 = vshll.u32 683565275, %v725
        %v729 = vshrl.u32 2475754826, %v726
        %v730 = vor.u32 %v728, %v729
        %v731 = vshll.u32 2475754826, %v725
        %v732 = vshrl.u32 2131351028, %v726
        %v733 = vor.u32 %v731, %v732
        %v734 = vshll.u32 2131351028, %v725
        %v735 = vshrl.u32 2102212464, %v726
        %v736 = vor.u32 %v734, %v735
        %v737 = vshll.u32 2102212464, %v725
        %v738 = vshrl.u32 920167782, %v726
        %v739 = vor.u32 %v737, %v738
        %v740 = vshll.u32 920167782, %v725
        %v741 = vshrl.u32 1326507024, %v726
        %v742 = vor.u32 %v740, %v741
        %vm743 = vcmp.lt.s32.totalorder %v724, 1
        %vm744 = vcmp.lt.s32.totalorder %v724, 2
        %vm745 = vcmp.lt.s32.totalorder %v724, 3
        %vm746 = vcmp.lt.s32.totalorder %v724, 4
        %v747 = vsel %vm743, %v727, %v730
        %v748 = vsel %vm746, %v736, 2102212464
        %v749 = vsel %vm745, %v733, %v748
        %v750 = vsel %vm744, %v747, %v749
        %v751 = vsel %vm743, %v730, %v733
        %v752 = vsel %vm746, %v739, 920167782
        %v753 = vsel %vm745, %v736, %v752
        %v754 = vsel %vm744, %v751, %v753
        %v755 = vsel %vm743, %v733, %v736
        %v756 = vsel %vm746, %v742, 1326507024
        %v757 = vsel %vm745, %v739, %v756
        %v758 = vsel %vm744, %v755, %v757
        %v759 = vshll.u32 %v719, 8
        %v760 = vmul.u32.u64.compose %v759, %v758
        %v761 = vextract.low.u32 %v760
        %v762 = vextract.high.u32 %v760
        %v763 = vmul.u32.u64.compose %v759, %v754
        %v764 = vextract.low.u32 %v763
        %v765 = vextract.high.u32 %v763
        %v766 = vmul.u32 %v759, %v750
        %v767 = vadd.s32 %v762, %v764
        %vm768 = vc.u32 %v762, %v764
        %v769 = vadd.s32 %v765, 1
        %v770 = vsel %vm768, %v769, %v765
        %v771 = vadd.s32 %v766, %v770
        %v772 = vadd.s32 %v771, 536870912
        %v773 = vshrl.u32 %v772, 30
        %v774 = vshll.u32 %v773, 30
        %v775 = vsub.s32 %v771, %v774
        %vm776 = vcmp.lt.s32.totalorder %v775, 0
        %v777 = vsub.s32 0, %v775
        %v778 = vsel %vm776, %v777, %v775
        %v779 = vclz %v778
        %v780 = vsub.s32 %v779, 2
        %vm781 = vcmp.gt.s32.totalorder 0, %v780
        %v782 = vsel %vm781, 0, %v780
        %v783 = vsub.s32 32, %v782
        %v784 = vshll.u32 %v775, %v782
        %v785 = vshrl.u32 %v767, %v783
        %v786 = vor.u32 %v784, %v785
        %v787 = vsub.s32 4294967266, %v782
        %v788 = vadd.s32 %v787, 127
        %v789 = vshll.u32 %v788, 23
        %v790 = vor.u32 4788187, %v789
        %v791 = vand.u32 2147483647, %v790
        %v793 = vcvt.s32.f32 %v786
        %v794 = vmul.f32 %v793, %v791
        %v795 = vxor.u32 %v794, 2147483648
        %v796 = vsel %vm713, %v795, %v794
        %v797 = vsub.s32 4, %v773
        %v798 = vsel %vm713, %v797, %v773
        %v799 = vsel %vm712, %v705, %v796
        %v800 = vsel %vm712, 0, %v798
        %v801 = vcosq.f32.pop %v799
        %v802 = vsinq.f32.pop %v799
        %vm803 = vweird.f32 %v705
        %v804 = vand.u32 %v800, 3
        %vm805 = vcmp.lt.s32.totalorder %v804, 2
        %vm806 = vcmp.eq.s32.totalorder %v804, 0
        %v807 = vxor.u32 %v802, 2147483648
        %v808 = vsel %vm806, %v801, %v807
        %vm809 = vcmp.eq.s32.totalorder %v804, 2
        %v810 = vxor.u32 %v801, 2147483648
        %v811 = vsel %vm809, %v810, %v802
        %v812 = vsel %vm805, %v808, %v811
        %v813 = vsel %vm803, nan, %v812
        %v814 = vand.u32 2147483647, %v706
        %vm815 = vcmp.le.f32.partialorder %v814, 0.7853982
        %vm816 = vcmp.lt.s32.totalorder %v706, 0
        %v817 = vand.u32 %v706, 2139095040
        %v818 = vshrl.u32 %v817, 23
        %v819 = vsub.s32 %v818, 127
        %v820 = vand.u32 2147483647, %v706
        %v821 = vand.u32 %v820, 8388607
        %v822 = vor.u32 %v821, 8388608
        %v823 = vsub.s32 0, %v822
        %v824 = vadd.s32 %v819, 1
        %vm825 = vcmp.gt.s32.totalorder %v824, 0
        %v826 = vsel %vm825, %v824, 0
        %v827 = vshrl.u32 %v826, 5
        %v828 = vand.u32 %v826, 31
        %v829 = vsub.s32 32, %v828
        %v830 = vshrl.u32 683565275, %v829
        %v831 = vshll.u32 683565275, %v828
        %v832 = vshrl.u32 2475754826, %v829
        %v833 = vor.u32 %v831, %v832
        %v834 = vshll.u32 2475754826, %v828
        %v835 = vshrl.u32 2131351028, %v829
        %v836 = vor.u32 %v834, %v835
        %v837 = vshll.u32 2131351028, %v828
        %v838 = vshrl.u32 2102212464, %v829
        %v839 = vor.u32 %v837, %v838
        %v840 = vshll.u32 2102212464, %v828
        %v841 = vshrl.u32 920167782, %v829
        %v842 = vor.u32 %v840, %v841
        %v843 = vshll.u32 920167782, %v828
        %v844 = vshrl.u32 1326507024, %v829
        %v845 = vor.u32 %v843, %v844
        %vm846 = vcmp.lt.s32.totalorder %v827, 1
        %vm847 = vcmp.lt.s32.totalorder %v827, 2
        %vm848 = vcmp.lt.s32.totalorder %v827, 3
        %vm849 = vcmp.lt.s32.totalorder %v827, 4
        %v850 = vsel %vm846, %v830, %v833
        %v851 = vsel %vm849, %v839, 2102212464
        %v852 = vsel %vm848, %v836, %v851
        %v853 = vsel %vm847, %v850, %v852
        %v854 = vsel %vm846, %v833, %v836
        %v855 = vsel %vm849, %v842, 920167782
        %v856 = vsel %vm848, %v839, %v855
        %v857 = vsel %vm847, %v854, %v856
        %v858 = vsel %vm846, %v836, %v839
        %v859 = vsel %vm849, %v845, 1326507024
        %v860 = vsel %vm848, %v842, %v859
        %v861 = vsel %vm847, %v858, %v860
        %v862 = vshll.u32 %v822, 8
        %v863 = vmul.u32.u64.compose %v862, %v861
        %v864 = vextract.low.u32 %v863
        %v865 = vextract.high.u32 %v863
        %v866 = vmul.u32.u64.compose %v862, %v857
        %v867 = vextract.low.u32 %v866
        %v868 = vextract.high.u32 %v866
        %v869 = vmul.u32 %v862, %v853
        %v870 = vadd.s32 %v865, %v867
        %vm871 = vc.u32 %v865, %v867
        %v872 = vadd.s32 %v868, 1
        %v873 = vsel %vm871, %v872, %v868
        %v874 = vadd.s32 %v869, %v873
        %v875 = vadd.s32 %v874, 536870912
        %v876 = vshrl.u32 %v875, 30
        %v877 = vshll.u32 %v876, 30
        %v878 = vsub.s32 %v874, %v877
        %vm879 = vcmp.lt.s32.totalorder %v878, 0
        %v880 = vsub.s32 0, %v878
        %v881 = vsel %vm879, %v880, %v878
        %v882 = vclz %v881
        %v883 = vsub.s32 %v882, 2
        %vm884 = vcmp.gt.s32.totalorder 0, %v883
        %v885 = vsel %vm884, 0, %v883
        %v886 = vsub.s32 32, %v885
        %v887 = vshll.u32 %v878, %v885
        %v888 = vshrl.u32 %v870, %v886
        %v889 = vor.u32 %v887, %v888
        %v890 = vsub.s32 4294967266, %v885
        %v891 = vadd.s32 %v890, 127
        %v892 = vshll.u32 %v891, 23
        %v893 = vor.u32 4788187, %v892
        %v894 = vand.u32 2147483647, %v893
        %v896 = vcvt.s32.f32 %v889
        %v897 = vmul.f32 %v896, %v894
        %v898 = vxor.u32 %v897, 2147483648
        %v899 = vsel %vm816, %v898, %v897
        %v900 = vsub.s32 4, %v876
        %v901 = vsel %vm816, %v900, %v876
        %v902 = vsel %vm815, %v706, %v899
        %v903 = vsel %vm815, 0, %v901
        %v904 = vcosq.f32.pop %v902
        %v905 = vsinq.f32.pop %v902
        %vm906 = vweird.f32 %v706
        %v907 = vand.u32 %v903, 3
        %vm908 = vcmp.lt.s32.totalorder %v907, 2
        %vm909 = vcmp.eq.s32.totalorder %v907, 0
        %v910 = vxor.u32 %v905, 2147483648
        %v911 = vsel %vm909, %v904, %v910
        %vm912 = vcmp.eq.s32.totalorder %v907, 2
        %v913 = vxor.u32 %v904, 2147483648
        %v914 = vsel %vm912, %v913, %v905
        %v915 = vsel %vm908, %v911, %v914
        %v916 = vsel %vm906, nan, %v915
        %v917 = vand.u32 2147483647, %v707
        %vm918 = vcmp.le.f32.partialorder %v917, 0.7853982
        %vm919 = vcmp.lt.s32.totalorder %v707, 0
        %v920 = vand.u32 %v707, 2139095040
        %v921 = vshrl.u32 %v920, 23
        %v922 = vsub.s32 %v921, 127
        %v923 = vand.u32 2147483647, %v707
        %v924 = vand.u32 %v923, 8388607
        %v925 = vor.u32 %v924, 8388608
        %v926 = vsub.s32 0, %v925
        %v927 = vadd.s32 %v922, 1
        %vm928 = vcmp.gt.s32.totalorder %v927, 0
        %v929 = vsel %vm928, %v927, 0
        %v930 = vshrl.u32 %v929, 5
        %v931 = vand.u32 %v929, 31
        %v932 = vsub.s32 32, %v931
        %v933 = vshrl.u32 683565275, %v932
        %v934 = vshll.u32 683565275, %v931
        %v935 = vshrl.u32 2475754826, %v932
        %v936 = vor.u32 %v934, %v935
        %v937 = vshll.u32 2475754826, %v931
        %v938 = vshrl.u32 2131351028, %v932
        %v939 = vor.u32 %v937, %v938
        %v940 = vshll.u32 2131351028, %v931
        %v941 = vshrl.u32 2102212464, %v932
        %v942 = vor.u32 %v940, %v941
        %v943 = vshll.u32 2102212464, %v931
        %v944 = vshrl.u32 920167782, %v932
        %v945 = vor.u32 %v943, %v944
        %v946 = vshll.u32 920167782, %v931
        %v947 = vshrl.u32 1326507024, %v932
        %v948 = vor.u32 %v946, %v947
        %vm949 = vcmp.lt.s32.totalorder %v930, 1
        %vm950 = vcmp.lt.s32.totalorder %v930, 2
        %vm951 = vcmp.lt.s32.totalorder %v930, 3
        %vm952 = vcmp.lt.s32.totalorder %v930, 4
        %v953 = vsel %vm949, %v933, %v936
        %v954 = vsel %vm952, %v942, 2102212464
        %v955 = vsel %vm951, %v939, %v954
        %v956 = vsel %vm950, %v953, %v955
        %v957 = vsel %vm949, %v936, %v939
        %v958 = vsel %vm952, %v945, 920167782
        %v959 = vsel %vm951, %v942, %v958
        %v960 = vsel %vm950, %v957, %v959
        %v961 = vsel %vm949, %v939, %v942
        %v962 = vsel %vm952, %v948, 1326507024
        %v963 = vsel %vm951, %v945, %v962
        %v964 = vsel %vm950, %v961, %v963
        %v965 = vshll.u32 %v925, 8
        %v966 = vmul.u32.u64.compose %v965, %v964
        %v967 = vextract.low.u32 %v966
        %v968 = vextract.high.u32 %v966
        %v969 = vmul.u32.u64.compose %v965, %v960
        %v970 = vextract.low.u32 %v969
        %v971 = vextract.high.u32 %v969
        %v972 = vmul.u32 %v965, %v956
        %v973 = vadd.s32 %v968, %v970
        %vm974 = vc.u32 %v968, %v970
        %v975 = vadd.s32 %v971, 1
        %v976 = vsel %vm974, %v975, %v971
        %v977 = vadd.s32 %v972, %v976
        %v978 = vadd.s32 %v977, 536870912
        %v979 = vshrl.u32 %v978, 30
        %v980 = vshll.u32 %v979, 30
        %v981 = vsub.s32 %v977, %v980
        %vm982 = vcmp.lt.s32.totalorder %v981, 0
        %v983 = vsub.s32 0, %v981
        %v984 = vsel %vm982, %v983, %v981
        %v985 = vclz %v984
        %v986 = vsub.s32 %v985, 2
        %vm987 = vcmp.gt.s32.totalorder 0, %v986
        %v988 = vsel %vm987, 0, %v986
        %v989 = vsub.s32 32, %v988
        %v990 = vshll.u32 %v981, %v988
        %v991 = vshrl.u32 %v973, %v989
        %v992 = vor.u32 %v990, %v991
        %v993 = vsub.s32 4294967266, %v988
        %v994 = vadd.s32 %v993, 127
        %v995 = vshll.u32 %v994, 23
        %v996 = vor.u32 4788187, %v995
        %v997 = vand.u32 2147483647, %v996
        %v999 = vcvt.s32.f32 %v992
        %v1000 = vmul.f32 %v999, %v997
        %v1001 = vxor.u32 %v1000, 2147483648
        %v1002 = vsel %vm919, %v1001, %v1000
        %v1003 = vsub.s32 4, %v979
        %v1004 = vsel %vm919, %v1003, %v979
        %v1005 = vsel %vm918, %v707, %v1002
        %v1006 = vsel %vm918, 0, %v1004
        %v1007 = vcosq.f32.pop %v1005
        %v1008 = vsinq.f32.pop %v1005
        %vm1009 = vweird.f32 %v707
        %v1010 = vand.u32 %v1006, 3
        %vm1011 = vcmp.lt.s32.totalorder %v1010, 2
        %vm1012 = vcmp.eq.s32.totalorder %v1010, 0
        %v1013 = vxor.u32 %v1008, 2147483648
        %v1014 = vsel %vm1012, %v1007, %v1013
        %vm1015 = vcmp.eq.s32.totalorder %v1010, 2
        %v1016 = vxor.u32 %v1007, 2147483648
        %v1017 = vsel %vm1015, %v1016, %v1008
        %v1018 = vsel %vm1011, %v1014, %v1017
        %v1019 = vsel %vm1009, nan, %v1018
        %v1020 = vand.u32 2147483647, %v708
        %vm1021 = vcmp.le.f32.partialorder %v1020, 0.7853982
        %vm1022 = vcmp.lt.s32.totalorder %v708, 0
        %v1023 = vand.u32 %v708, 2139095040
        %v1024 = vshrl.u32 %v1023, 23
        %v1025 = vsub.s32 %v1024, 127
        %v1026 = vand.u32 2147483647, %v708
        %v1027 = vand.u32 %v1026, 8388607
        %v1028 = vor.u32 %v1027, 8388608
        %v1029 = vsub.s32 0, %v1028
        %v1030 = vadd.s32 %v1025, 1
        %vm1031 = vcmp.gt.s32.totalorder %v1030, 0
        %v1032 = vsel %vm1031, %v1030, 0
        %v1033 = vshrl.u32 %v1032, 5
        %v1034 = vand.u32 %v1032, 31
        %v1035 = vsub.s32 32, %v1034
        %v1036 = vshrl.u32 683565275, %v1035
        %v1037 = vshll.u32 683565275, %v1034
        %v1038 = vshrl.u32 2475754826, %v1035
        %v1039 = vor.u32 %v1037, %v1038
        %v1040 = vshll.u32 2475754826, %v1034
        %v1041 = vshrl.u32 2131351028, %v1035
        %v1042 = vor.u32 %v1040, %v1041
        %v1043 = vshll.u32 2131351028, %v1034
        %v1044 = vshrl.u32 2102212464, %v1035
        %v1045 = vor.u32 %v1043, %v1044
        %v1046 = vshll.u32 2102212464, %v1034
        %v1047 = vshrl.u32 920167782, %v1035
        %v1048 = vor.u32 %v1046, %v1047
        %v1049 = vshll.u32 920167782, %v1034
        %v1050 = vshrl.u32 1326507024, %v1035
        %v1051 = vor.u32 %v1049, %v1050
        %vm1052 = vcmp.lt.s32.totalorder %v1033, 1
        %vm1053 = vcmp.lt.s32.totalorder %v1033, 2
        %vm1054 = vcmp.lt.s32.totalorder %v1033, 3
        %vm1055 = vcmp.lt.s32.totalorder %v1033, 4
        %v1056 = vsel %vm1052, %v1036, %v1039
        %v1057 = vsel %vm1055, %v1045, 2102212464
        %v1058 = vsel %vm1054, %v1042, %v1057
        %v1059 = vsel %vm1053, %v1056, %v1058
        %v1060 = vsel %vm1052, %v1039, %v1042
        %v1061 = vsel %vm1055, %v1048, 920167782
        %v1062 = vsel %vm1054, %v1045, %v1061
        %v1063 = vsel %vm1053, %v1060, %v1062
        %v1064 = vsel %vm1052, %v1042, %v1045
        %v1065 = vsel %vm1055, %v1051, 1326507024
        %v1066 = vsel %vm1054, %v1048, %v1065
        %v1067 = vsel %vm1053, %v1064, %v1066
        %v1068 = vshll.u32 %v1028, 8
        %v1069 = vmul.u32.u64.compose %v1068, %v1067
        %v1070 = vextract.low.u32 %v1069
        %v1071 = vextract.high.u32 %v1069
        %v1072 = vmul.u32.u64.compose %v1068, %v1063
        %v1073 = vextract.low.u32 %v1072
        %v1074 = vextract.high.u32 %v1072
        %v1075 = vmul.u32 %v1068, %v1059
        %v1076 = vadd.s32 %v1071, %v1073
        %vm1077 = vc.u32 %v1071, %v1073
        %v1078 = vadd.s32 %v1074, 1
        %v1079 = vsel %vm1077, %v1078, %v1074
        %v1080 = vadd.s32 %v1075, %v1079
        %v1081 = vadd.s32 %v1080, 536870912
        %v1082 = vshrl.u32 %v1081, 30
        %v1083 = vshll.u32 %v1082, 30
        %v1084 = vsub.s32 %v1080, %v1083
        %vm1085 = vcmp.lt.s32.totalorder %v1084, 0
        %v1086 = vsub.s32 0, %v1084
        %v1087 = vsel %vm1085, %v1086, %v1084
        %v1088 = vclz %v1087
        %v1089 = vsub.s32 %v1088, 2
        %vm1090 = vcmp.gt.s32.totalorder 0, %v1089
        %v1091 = vsel %vm1090, 0, %v1089
        %v1092 = vsub.s32 32, %v1091
        %v1093 = vshll.u32 %v1084, %v1091
        %v1094 = vshrl.u32 %v1076, %v1092
        %v1095 = vor.u32 %v1093, %v1094
        %v1096 = vsub.s32 4294967266, %v1091
        %v1097 = vadd.s32 %v1096, 127
        %v1098 = vshll.u32 %v1097, 23
        %v1099 = vor.u32 4788187, %v1098
        %v1100 = vand.u32 2147483647, %v1099
        %v1102 = vcvt.s32.f32 %v1095
        %v1103 = vmul.f32 %v1102, %v1100
        %v1104 = vxor.u32 %v1103, 2147483648
        %v1105 = vsel %vm1022, %v1104, %v1103
        %v1106 = vsub.s32 4, %v1082
        %v1107 = vsel %vm1022, %v1106, %v1082
        %v1108 = vsel %vm1021, %v708, %v1105
        %v1109 = vsel %vm1021, 0, %v1107
        %v1110 = vcosq.f32.pop %v1108
        %v1111 = vsinq.f32.pop %v1108
        %vm1112 = vweird.f32 %v708
        %v1113 = vand.u32 %v1109, 3
        %vm1114 = vcmp.lt.s32.totalorder %v1113, 2
        %vm1115 = vcmp.eq.s32.totalorder %v1113, 0
        %v1116 = vxor.u32 %v1111, 2147483648
        %v1117 = vsel %vm1115, %v1110, %v1116
        %vm1118 = vcmp.eq.s32.totalorder %v1113, 2
        %v1119 = vxor.u32 %v1110, 2147483648
        %v1120 = vsel %vm1118, %v1119, %v1111
        %v1121 = vsel %vm1114, %v1117, %v1120
        %v1122 = vsel %vm1112, nan, %v1121
        %v1123 = vand.u32 2147483647, %v709
        %vm1124 = vcmp.le.f32.partialorder %v1123, 0.7853982
        %vm1125 = vcmp.lt.s32.totalorder %v709, 0
        %v1126 = vand.u32 %v709, 2139095040
        %v1127 = vshrl.u32 %v1126, 23
        %v1128 = vsub.s32 %v1127, 127
        %v1129 = vand.u32 2147483647, %v709
        %v1130 = vand.u32 %v1129, 8388607
        %v1131 = vor.u32 %v1130, 8388608
        %v1132 = vsub.s32 0, %v1131
        %v1133 = vadd.s32 %v1128, 1
        %vm1134 = vcmp.gt.s32.totalorder %v1133, 0
        %v1135 = vsel %vm1134, %v1133, 0
        %v1136 = vshrl.u32 %v1135, 5
        %v1137 = vand.u32 %v1135, 31
        %v1138 = vsub.s32 32, %v1137
        %v1139 = vshrl.u32 683565275, %v1138
        %v1140 = vshll.u32 683565275, %v1137
        %v1141 = vshrl.u32 2475754826, %v1138
        %v1142 = vor.u32 %v1140, %v1141
        %v1143 = vshll.u32 2475754826, %v1137
        %v1144 = vshrl.u32 2131351028, %v1138
        %v1145 = vor.u32 %v1143, %v1144
        %v1146 = vshll.u32 2131351028, %v1137
        %v1147 = vshrl.u32 2102212464, %v1138
        %v1148 = vor.u32 %v1146, %v1147
        %v1149 = vshll.u32 2102212464, %v1137
        %v1150 = vshrl.u32 920167782, %v1138
        %v1151 = vor.u32 %v1149, %v1150
        %v1152 = vshll.u32 920167782, %v1137
        %v1153 = vshrl.u32 1326507024, %v1138
        %v1154 = vor.u32 %v1152, %v1153
        %vm1155 = vcmp.lt.s32.totalorder %v1136, 1
        %vm1156 = vcmp.lt.s32.totalorder %v1136, 2
        %vm1157 = vcmp.lt.s32.totalorder %v1136, 3
        %vm1158 = vcmp.lt.s32.totalorder %v1136, 4
        %v1159 = vsel %vm1155, %v1139, %v1142
        %v1160 = vsel %vm1158, %v1148, 2102212464
        %v1161 = vsel %vm1157, %v1145, %v1160
        %v1162 = vsel %vm1156, %v1159, %v1161
        %v1163 = vsel %vm1155, %v1142, %v1145
        %v1164 = vsel %vm1158, %v1151, 920167782
        %v1165 = vsel %vm1157, %v1148, %v1164
        %v1166 = vsel %vm1156, %v1163, %v1165
        %v1167 = vsel %vm1155, %v1145, %v1148
        %v1168 = vsel %vm1158, %v1154, 1326507024
        %v1169 = vsel %vm1157, %v1151, %v1168
        %v1170 = vsel %vm1156, %v1167, %v1169
        %v1171 = vshll.u32 %v1131, 8
        %v1172 = vmul.u32.u64.compose %v1171, %v1170
        %v1173 = vextract.low.u32 %v1172
        %v1174 = vextract.high.u32 %v1172
        %v1175 = vmul.u32.u64.compose %v1171, %v1166
        %v1176 = vextract.low.u32 %v1175
        %v1177 = vextract.high.u32 %v1175
        %v1178 = vmul.u32 %v1171, %v1162
        %v1179 = vadd.s32 %v1174, %v1176
        %vm1180 = vc.u32 %v1174, %v1176
        %v1181 = vadd.s32 %v1177, 1
        %v1182 = vsel %vm1180, %v1181, %v1177
        %v1183 = vadd.s32 %v1178, %v1182
        %v1184 = vadd.s32 %v1183, 536870912
        %v1185 = vshrl.u32 %v1184, 30
        %v1186 = vshll.u32 %v1185, 30
        %v1187 = vsub.s32 %v1183, %v1186
        %vm1188 = vcmp.lt.s32.totalorder %v1187, 0
        %v1189 = vsub.s32 0, %v1187
        %v1190 = vsel %vm1188, %v1189, %v1187
        %v1191 = vclz %v1190
        %v1192 = vsub.s32 %v1191, 2
        %vm1193 = vcmp.gt.s32.totalorder 0, %v1192
        %v1194 = vsel %vm1193, 0, %v1192
        %v1195 = vsub.s32 32, %v1194
        %v1196 = vshll.u32 %v1187, %v1194
        %v1197 = vshrl.u32 %v1179, %v1195
        %v1198 = vor.u32 %v1196, %v1197
        %v1199 = vsub.s32 4294967266, %v1194
        %v1200 = vadd.s32 %v1199, 127
        %v1201 = vshll.u32 %v1200, 23
        %v1202 = vor.u32 4788187, %v1201
        %v1203 = vand.u32 2147483647, %v1202
        %v1205 = vcvt.s32.f32 %v1198
        %v1206 = vmul.f32 %v1205, %v1203
        %v1207 = vxor.u32 %v1206, 2147483648
        %v1208 = vsel %vm1125, %v1207, %v1206
        %v1209 = vsub.s32 4, %v1185
        %v1210 = vsel %vm1125, %v1209, %v1185
        %v1211 = vsel %vm1124, %v709, %v1208
        %v1212 = vsel %vm1124, 0, %v1210
        %v1213 = vcosq.f32.pop %v1211
        %v1214 = vsinq.f32.pop %v1211
        %vm1215 = vweird.f32 %v709
        %v1216 = vand.u32 %v1212, 3
        %vm1217 = vcmp.lt.s32.totalorder %v1216, 2
        %vm1218 = vcmp.eq.s32.totalorder %v1216, 0
        %v1219 = vxor.u32 %v1214, 2147483648
        %v1220 = vsel %vm1218, %v1213, %v1219
        %vm1221 = vcmp.eq.s32.totalorder %v1216, 2
        %v1222 = vxor.u32 %v1213, 2147483648
        %v1223 = vsel %vm1221, %v1222, %v1214
        %v1224 = vsel %vm1217, %v1220, %v1223
        %v1225 = vsel %vm1215, nan, %v1224
        %v1226 = vand.u32 2147483647, %v710
        %vm1227 = vcmp.le.f32.partialorder %v1226, 0.7853982
        %vm1228 = vcmp.lt.s32.totalorder %v710, 0
        %v1229 = vand.u32 %v710, 2139095040
        %v1230 = vshrl.u32 %v1229, 23
        %v1231 = vsub.s32 %v1230, 127
        %v1232 = vand.u32 2147483647, %v710
        %v1233 = vand.u32 %v1232, 8388607
        %v1234 = vor.u32 %v1233, 8388608
        %v1235 = vsub.s32 0, %v1234
        %v1236 = vadd.s32 %v1231, 1
        %vm1237 = vcmp.gt.s32.totalorder %v1236, 0
        %v1238 = vsel %vm1237, %v1236, 0
        %v1239 = vshrl.u32 %v1238, 5
        %v1240 = vand.u32 %v1238, 31
        %v1241 = vsub.s32 32, %v1240
        %v1242 = vshrl.u32 683565275, %v1241
        %v1243 = vshll.u32 683565275, %v1240
        %v1244 = vshrl.u32 2475754826, %v1241
        %v1245 = vor.u32 %v1243, %v1244
        %v1246 = vshll.u32 2475754826, %v1240
        %v1247 = vshrl.u32 2131351028, %v1241
        %v1248 = vor.u32 %v1246, %v1247
        %v1249 = vshll.u32 2131351028, %v1240
        %v1250 = vshrl.u32 2102212464, %v1241
        %v1251 = vor.u32 %v1249, %v1250
        %v1252 = vshll.u32 2102212464, %v1240
        %v1253 = vshrl.u32 920167782, %v1241
        %v1254 = vor.u32 %v1252, %v1253
        %v1255 = vshll.u32 920167782, %v1240
        %v1256 = vshrl.u32 1326507024, %v1241
        %v1257 = vor.u32 %v1255, %v1256
        %vm1258 = vcmp.lt.s32.totalorder %v1239, 1
        %vm1259 = vcmp.lt.s32.totalorder %v1239, 2
        %vm1260 = vcmp.lt.s32.totalorder %v1239, 3
        %vm1261 = vcmp.lt.s32.totalorder %v1239, 4
        %v1262 = vsel %vm1258, %v1242, %v1245
        %v1263 = vsel %vm1261, %v1251, 2102212464
        %v1264 = vsel %vm1260, %v1248, %v1263
        %v1265 = vsel %vm1259, %v1262, %v1264
        %v1266 = vsel %vm1258, %v1245, %v1248
        %v1267 = vsel %vm1261, %v1254, 920167782
        %v1268 = vsel %vm1260, %v1251, %v1267
        %v1269 = vsel %vm1259, %v1266, %v1268
        %v1270 = vsel %vm1258, %v1248, %v1251
        %v1271 = vsel %vm1261, %v1257, 1326507024
        %v1272 = vsel %vm1260, %v1254, %v1271
        %v1273 = vsel %vm1259, %v1270, %v1272
        %v1274 = vshll.u32 %v1234, 8
        %v1275 = vmul.u32.u64.compose %v1274, %v1273
        %v1276 = vextract.low.u32 %v1275
        %v1277 = vextract.high.u32 %v1275
        %v1278 = vmul.u32.u64.compose %v1274, %v1269
        %v1279 = vextract.low.u32 %v1278
        %v1280 = vextract.high.u32 %v1278
        %v1281 = vmul.u32 %v1274, %v1265
        %v1282 = vadd.s32 %v1277, %v1279
        %vm1283 = vc.u32 %v1277, %v1279
        %v1284 = vadd.s32 %v1280, 1
        %v1285 = vsel %vm1283, %v1284, %v1280
        %v1286 = vadd.s32 %v1281, %v1285
        %v1287 = vadd.s32 %v1286, 536870912
        %v1288 = vshrl.u32 %v1287, 30
        %v1289 = vshll.u32 %v1288, 30
        %v1290 = vsub.s32 %v1286, %v1289
        %vm1291 = vcmp.lt.s32.totalorder %v1290, 0
        %v1292 = vsub.s32 0, %v1290
        %v1293 = vsel %vm1291, %v1292, %v1290
        %v1294 = vclz %v1293
        %v1295 = vsub.s32 %v1294, 2
        %vm1296 = vcmp.gt.s32.totalorder 0, %v1295
        %v1297 = vsel %vm1296, 0, %v1295
        %v1298 = vsub.s32 32, %v1297
        %v1299 = vshll.u32 %v1290, %v1297
        %v1300 = vshrl.u32 %v1282, %v1298
        %v1301 = vor.u32 %v1299, %v1300
        %v1302 = vsub.s32 4294967266, %v1297
        %v1303 = vadd.s32 %v1302, 127
        %v1304 = vshll.u32 %v1303, 23
        %v1305 = vor.u32 4788187, %v1304
        %v1306 = vand.u32 2147483647, %v1305
        %v1308 = vcvt.s32.f32 %v1301
        %v1309 = vmul.f32 %v1308, %v1306
        %v1310 = vxor.u32 %v1309, 2147483648
        %v1311 = vsel %vm1228, %v1310, %v1309
        %v1312 = vsub.s32 4, %v1288
        %v1313 = vsel %vm1228, %v1312, %v1288
        %v1314 = vsel %vm1227, %v710, %v1311
        %v1315 = vsel %vm1227, 0, %v1313
        %v1316 = vcosq.f32.pop %v1314
        %v1317 = vsinq.f32.pop %v1314
        %vm1318 = vweird.f32 %v710
        %v1319 = vand.u32 %v1315, 3
        %vm1320 = vcmp.lt.s32.totalorder %v1319, 2
        %vm1321 = vcmp.eq.s32.totalorder %v1319, 0
        %v1322 = vxor.u32 %v1317, 2147483648
        %v1323 = vsel %vm1321, %v1316, %v1322
        %vm1324 = vcmp.eq.s32.totalorder %v1319, 2
        %v1325 = vxor.u32 %v1316, 2147483648
        %v1326 = vsel %vm1324, %v1325, %v1317
        %v1327 = vsel %vm1320, %v1323, %v1326
        %v1328 = vsel %vm1318, nan, %v1327
        %1329 = vst [vmem:[%s245] sm:$0xff] %v813
        %1330 = vst [vmem:[%s245 + $0x8] sm:$0xff] %v916
        %1331 = vst [vmem:[%s245 + $0x10] sm:$0xff] %v1019
        %1332 = vst [vmem:[%s245 + $0x18] sm:$0xff] %v1122
        %1333 = vst [vmem:[%s245 + $0x20] sm:$0xff] %v1225
        %1334 = vst [vmem:[%s245 + $0x28] sm:$0xff] %v1328
        %s1335 = sand.u32 %s125, 1
        %s1336 = scalar_lea.sflag [#allocation3], %s1335
        %s1337 = sand.u32 %s125, 1
        %s1338 = smul.addr %s1337, 24
        %s1339 = scalar_lea.vmem [#allocation2], %s1338
        %s1340 = sand.u32 %s151, 1
        %s1341 = scalar_lea.sflag [#allocation5], %s1340
        %s1342 = sand.u32 %s151, 1
        %s1343 = smul.addr %s1342, 48
        %s1344 = scalar_lea.vmem [#allocation4], %s1343
        // Predicated region
        $region41: #{tpu_custom_call.1} parent=35 // pred_check
          %p1345 = pneg %p135
        $region42: #{tpu_custom_call.1} parent=35 // pred_check_branch
          %1347 = sbr.rel (%p1345) target = $region44
        $region43: #{tpu_custom_call.1} parent=35 // pred_region
          %s1348 = smul.u32 6, %s23
          %s1350 = ssub.s32 384, 384
          %1351 = vsyncadd %s1336, %s1350
          %s1352 = smul.addr %s1348, 64
          %s1353 = scalar_lea.hbm %s4, %s1352
          %s1354 = sshll.u32 %s1339, 4
          %s1355 = int_to_ptr.vmem [resolvable:$true] %s1354
          %1360 = dma.vmem_to_hbm [thread:$0]  %s1355, 384, %s1353, %s1336, 64, 64, 4
        $region44: #{tpu_custom_call.1} parent=35 // pred_fallthru
          _
        // Predicated region
        $region45: #{tpu_custom_call.1} parent=35 // pred_check
          %p1361 = pneg %p161
        $region46: #{tpu_custom_call.1} parent=35 // pred_check_branch
          %1363 = sbr.rel (%p1361) target = $region48
        $region47: #{tpu_custom_call.1} parent=35 // pred_region
          %s1364 = smul.u32 6, %s23
          %s1366 = ssub.s32 768, 768
          %1367 = vsyncadd %s1341, %s1366
          %s1368 = smul.addr %s1364, 128
          %s1369 = scalar_lea.hbm %s5, %s1368
          %s1370 = sshll.u32 %s1344, 4
          %s1371 = int_to_ptr.vmem [resolvable:$true] %s1370
          %1376 = dma.vmem_to_hbm [thread:$0]  %s1371, 768, %s1369, %s1341, 128, 128, 8
        $region48: #{tpu_custom_call.1} parent=35 // pred_fallthru
          _
      $region36: #{tpu_custom_call.1} parent=5 // pred_fallthru
        _
      %p1377 = scmp.le.s32.totalorder 2, %s18
      // Predicated region
      $region49: #{tpu_custom_call.1} parent=5 // pred_check
        %p1378 = pneg %p1377
      $region50: #{tpu_custom_call.1} parent=5 // pred_check_branch
        %1380 = sbr.rel (%p1378) target = $region52
      $region51: #{tpu_custom_call.1} parent=5 // pred_region
        %s1381 = ssub.s32 %s18, 2
        // Predicated region
        $region53: #{tpu_custom_call.1} parent=51 // pred_check
          %p1382 = pneg %p141
        $region54: #{tpu_custom_call.1} parent=51 // pred_check_branch
          %1384 = sbr.rel (%p1382) target = $region56
        $region55: #{tpu_custom_call.1} parent=51 // pred_region
          %s1385 = sand.u32 %s126, 1
          %s1386 = scalar_lea.sflag [#allocation3], %s1385
          %s1387 = sand.u32 %s126, 1
          %s1388 = smul.addr %s1387, 24
          %s1389 = scalar_lea.vmem [#allocation2], %s1388
          %1390 = dma.done %s1386, 384
        $region56: #{tpu_custom_call.1} parent=51 // pred_fallthru
          _
        // Predicated region
        $region57: #{tpu_custom_call.1} parent=51 // pred_check
          %p1391 = pneg %p167
        $region58: #{tpu_custom_call.1} parent=51 // pred_check_branch
          %1393 = sbr.rel (%p1391) target = $region60
        $region59: #{tpu_custom_call.1} parent=51 // pred_region
          %s1394 = sand.u32 %s152, 1
          %s1395 = scalar_lea.sflag [#allocation5], %s1394
          %s1396 = sand.u32 %s152, 1
          %s1397 = smul.addr %s1396, 48
          %s1398 = scalar_lea.vmem [#allocation4], %s1397
          %1399 = dma.done %s1395, 768
        $region60: #{tpu_custom_call.1} parent=51 // pred_fallthru
          _
      $region52: #{tpu_custom_call.1} parent=5 // pred_fallthru
        _
    $region6: #{tpu_custom_call.1} parent=1 // loop_footer
      %s22 = sadd.s32 1, %s18
    $region7: #{tpu_custom_call.1} parent=1 // loop_footer_branch
      %17 = sbr.rel target = $region3
    $region8: #{tpu_custom_call.1} parent=1 // loop_exit
      _
    %1400 = vsyncpa [#allocation3], 1
    %s1401 = scalar_lea.sflag [#allocation3], 1
    %1402 = vsyncpa %s1401, 1
    %1403 = vsyncpa [#allocation5], 1
    %s1404 = scalar_lea.sflag [#allocation5], 1
    %1405 = vsyncpa %s1404, 1

</llo_original>
